<compile_context>
chip_gen: v7x
topology: tpu7x:2x2x1
jax: 0.10.0
libtpu: 0.0.40
codegen_flags: <defaults>
</compile_context>

<pallas_src>
import functools

import jax
import jax.numpy as jnp
from jax.experimental import pallas as pl
from jax.experimental.pallas import tpu as pltpu

NUM_FREQS = 6                                   # embedder octaves (include_input=True)
UVT_DIM   = 3                                   # uv (2) + frame time (1)
EMB_DIM   = UVT_DIM * (1 + 2 * NUM_FREQS)       # 39 == embedder.out_dim
EMB_PAD   = EMB_DIM + 1                         # 40: +1 ones-row (bias) -> 8-aligned
HIDDEN    = 32
OUT_DIM   = 3
MAX_TILE_N = 2048                               # points per grid step (sweepable)


def _round_up(x, m):
    return ((x + m - 1) // m) * m


def _act_dtype():
    """bf16 activations only where the VPU/EUP support them (v6e/v7x)."""
    try:
        kind = jax.devices()[0].device_kind.lower()
    except Exception:
        return jnp.float32
    if any(tag in kind for tag in ("v6", "v7", "tpu7", "7x")):
        return jnp.bfloat16
    return jnp.float32


# ----------------------------------------------------------------------------
# Pallas kernel (feature-major):
#   emb(40, T) = [x | sin(2^i x), cos(2^i x) for i<6 | ones]   (ones row = bias1)
#   h1 = softplus(W1' @ emb)        W1' : (32, 40)  (bias folded in col 39)
#   h2 = softplus(W2  @ h1 + b2)    W2  : (32, 32)
#   r  = W3 @ h2 + b3               W3  : (3, 32)
#   out = 0.05 * tanh(r)
# ----------------------------------------------------------------------------
def _deformer_mlp_kernel(uvt_ref, w1t_ref, w2t_ref, b2_ref, w3t_ref, b3_ref,
                         out_ref, emb_ref, *, act_dtype):
    x = uvt_ref[...]                                      # (3, T) f32

    # ---- frequency embedding into VMEM scratch (single K=40 matmul later) ----
    emb_ref[0:UVT_DIM, :] = x
    s = jnp.sin(x)                                        # EUP: only base freq
    c = jnp.cos(x)
    emb_ref[UVT_DIM:2 * UVT_DIM, :] = s
    emb_ref[2 * UVT_DIM:3 * UVT_DIM, :] = c
    for i in range(1, NUM_FREQS):
        # double-angle recurrence on the VPU (no extra transcendentals)
        s, c = 2.0 * s * c, 1.0 - 2.0 * s * s
        r0 = (1 + 2 * i) * UVT_DIM
        emb_ref[r0:r0 + UVT_DIM, :] = s
        emb_ref[r0 + UVT_DIM:r0 + 2 * UVT_DIM, :] = c
    # constant-ones row: folds the first-layer bias into w1t's last column
    emb_ref[EMB_DIM:EMB_PAD, :] = jnp.ones_like(x[:EMB_PAD - EMB_DIM])

    emb = emb_ref[...].astype(act_dtype)                  # (40, T)

    # ---- Linear(39->32) + Softplus ----
    h = jnp.dot(w1t_ref[...], emb, preferred_element_type=jnp.float32)
    h = jax.nn.softplus(h.astype(act_dtype))
    # ---- Linear(32->32) + Softplus ----
    h = jnp.dot(w2t_ref[...], h, preferred_element_type=jnp.float32) + b2_ref[...]
    h = jax.nn.softplus(h.astype(act_dtype))
    # ---- Linear(32->3), 0.05 * tanh ----
    r = jnp.dot(w3t_ref[...], h, preferred_element_type=jnp.float32) + b3_ref[...]
    t = jnp.tanh(r.astype(act_dtype)).astype(jnp.float32)  # scale in f32 (keeps |out|<=0.05)
    out_ref[...] = (0.05 * t).astype(out_ref.dtype)


def deformer_mlp(uvt_fm, params, *, max_tile_n=MAX_TILE_N):
    """uvt_fm: (3, N) float32, feature-major -> (3, N) float32 = 0.05*tanh(MLP(embed))."""
    w1t, w2t, b2, w3t, b3 = params
    n = uvt_fm.shape[1]
    act = _act_dtype()

    # Tile selection: biggest tile that fits, but keep >= 2 grid steps when the
    # problem allows it so the v7x megacore can split the grid across its 2 TCs.
    n_aligned = _round_up(max(n, 1), 128)
    tile_n = min(max_tile_n, n_aligned)
    if (n_aligned // tile_n) < 2 and n_aligned >= 256:
        tile_n = _round_up(-(-n_aligned // 2), 128)
    grid_n = pl.cdiv(n, tile_n)        # last block may be partial; OOB writes are masked

    kernel = functools.partial(_deformer_mlp_kernel, act_dtype=act)

    out = pl.pallas_call(
        kernel,
        out_shape=jax.ShapeDtypeStruct((OUT_DIM, n), jnp.float32),
        grid_spec=pltpu.PrefetchScalarGridSpec(
            num_scalar_prefetch=0,
            grid=(grid_n,),
            in_specs=[
                pl.BlockSpec((UVT_DIM, tile_n), lambda i: (0, i)),
                pl.BlockSpec((HIDDEN, EMB_PAD), lambda i: (0, 0)),   # W1'(+b1)
                pl.BlockSpec((HIDDEN, HIDDEN), lambda i: (0, 0)),    # W2
                pl.BlockSpec((HIDDEN, 1), lambda i: (0, 0)),         # b2
                pl.BlockSpec((OUT_DIM, HIDDEN), lambda i: (0, 0)),   # W3
                pl.BlockSpec((OUT_DIM, 1), lambda i: (0, 0)),        # b3
            ],
            out_specs=pl.BlockSpec((OUT_DIM, tile_n), lambda i: (0, i)),
            scratch_shapes=[pltpu.VMEM((EMB_PAD, tile_n), jnp.float32)],
        ),
        compiler_params=pltpu.CompilerParams(
            dimension_semantics=("parallel",)),
    )(uvt_fm, w1t.astype(act), w2t.astype(act), b2, w3t.astype(act), b3)
    return out


# ----------------------------------------------------------------------------
# Plain-JAX glue: pts_sample_uv (trilinear grid-sample gather) + forward wiring
# ----------------------------------------------------------------------------
def pts_sample_uv(xyz, fuv, pbounds):
    """xyz: (B, NP, 3), fuv: (B, 2, D, H, W), pbounds: (B, 2, 3) -> (B, 2, NP)."""
    # TODO(synk): XLA gather is slow on TPU; for small volumes this could be a
    # one-hot matmul or scalar-prefetched indices folded into the Pallas kernel.
    B, C, D, H, W = fuv.shape
    mn = pbounds[:, 0:1]
    mx = pbounds[:, 1:2]
    grid = (xyz - mn) / (mx - mn) * 2.0 - 1.0             # (B, NP, 3) in [-1, 1]

    xs = ((grid[..., 0] + 1.0) * W - 1.0) / 2.0
    ys = ((grid[..., 1] + 1.0) * H - 1.0) / 2.0
    zs = ((grid[..., 2] + 1.0) * D - 1.0) / 2.0

    x0 = jnp.floor(xs); y0 = jnp.floor(ys); z0 = jnp.floor(zs)
    x1, y1, z1 = x0 + 1.0, y0 + 1.0, z0 + 1.0
    wx1, wy1, wz1 = xs - x0, ys - y0, zs - z0
    wx0, wy0, wz0 = 1.0 - wx1, 1.0 - wy1, 1.0 - wz1

    def gather(ix, iy, iz):
        inb = ((ix >= 0) & (ix < W) & (iy >= 0) & (iy < H)
               & (iz >= 0) & (iz < D)).astype(fuv.dtype)
        ixc = jnp.clip(ix, 0, W - 1).astype(jnp.int32)
        iyc = jnp.clip(iy, 0, H - 1).astype(jnp.int32)
        izc = jnp.clip(iz, 0, D - 1).astype(jnp.int32)
        v = jax.vmap(lambda vb, zb, yb, xb: vb[:, zb, yb, xb])(fuv, izc, iyc, ixc)
        return v * inb[:, None, :]                        # zeros padding

    out = (gather(x0, y0, z0) * (wx0 * wy0 * wz0)[:, None, :]
           + gather(x1, y0, z0) * (wx1 * wy0 * wz0)[:, None, :]
           + gather(x0, y1, z0) * (wx0 * wy1 * wz0)[:, None, :]
           + gather(x1, y1, z0) * (wx1 * wy1 * wz0)[:, None, :]
           + gather(x0, y0, z1) * (wx0 * wy0 * wz1)[:, None, :]
           + gather(x1, y0, z1) * (wx1 * wy0 * wz1)[:, None, :]
           + gather(x0, y1, z1) * (wx0 * wy1 * wz1)[:, None, :]
           + gather(x1, y1, z1) * (wx1 * wy1 * wz1)[:, None, :])
    return out                                            # (B, 2, NP)


def deformer_forward(xyz, batch, params, flag=None):
    B, NP, _ = xyz.shape
    uv = pts_sample_uv(xyz, batch['fuv'], batch['pbounds'])        # (B, 2, NP)

    # feature-major uvt: (3, B*NP); point order matches torch permute(0,2,1).view(-1,2)
    uv_fm = jnp.transpose(uv, (1, 0, 2)).reshape(uv.shape[1], -1)  # (2, B*NP)
    fd = batch['frame_dim'].astype(jnp.float32).reshape(-1, 1)     # (Ft, 1)
    t_fm = jnp.broadcast_to(fd, (fd.shape[0], uv_fm.shape[1]))
    uvt_fm = jnp.concatenate([uv_fm, t_fm], axis=0)                # (3, B*NP)
    assert uvt_fm.shape[0] == UVT_DIM, "frame_dim width must be 1"

    resd_fm = deformer_mlp(uvt_fm, params)                         # (3, B*NP)
    resd_tan = resd_fm.T                                           # (B*NP, 3)

    if flag is not None:
        # TODO(synk): torch uses a data-dependent nonzero gather + scatter;
        # since the deformer is pointwise, masking is semantically equivalent.
        assert B == 1
        ret = resd_tan.reshape(B, NP, 3)
        return jnp.where(flag[..., None] != 0, ret, jnp.zeros_like(ret))
    return resd_tan


def init_mlp_params(key):
    """PyTorch-Linear-style init U(-1/sqrt(fan_in), 1/sqrt(fan_in)), stored
    feature-major as (out, in) matrices for W @ x; b1 folded into W1."""
    dims = [(EMB_DIM, HIDDEN), (HIDDEN, HIDDEN), (HIDDEN, OUT_DIM)]
    mats = []
    for fan_in, fan_out in dims:
        key, kw, kb = jax.random.split(key, 3)
        bound = 1.0 / (fan_in ** 0.5)
        w = jax.random.uniform(kw, (fan_out, fan_in), jnp.float32, -bound, bound)
        b = jax.random.uniform(kb, (fan_out, 1), jnp.float32, -bound, bound)
        mats.append((w, b))
    (w1, b1), (w2, b2), (w3, b3) = mats
    w1t = jnp.concatenate([w1, b1], axis=1)                # (HIDDEN, EMB_PAD=40)
    return (w1t, w2, b2, w3, b3)


if __name__ == "__main__":
    key = jax.random.PRNGKey(0)
    k_xyz, k_fuv, k_par = jax.random.split(key, 3)

    B, NP = 1, 512
    D = H = W = 8
    xyz = jax.random.uniform(k_xyz, (B, NP, 3), jnp.float32, -0.8, 0.8)
    fuv = jax.random.uniform(k_fuv, (B, 2, D, H, W), jnp.float32, 0.0, 1.0)
    pbounds = jnp.array([[[-1.0, -1.0, -1.0], [1.0, 1.0, 1.0]]], jnp.float32)
    frame_dim = jnp.array([[0.3]], jnp.float32)
    batch = {'fuv': fuv, 'pbounds': pbounds, 'frame_dim': frame_dim}

    params = init_mlp_params(k_par)

    out = deformer_forward(xyz, batch, params, flag=None)
    out = jax.block_until_ready(out)
    assert out.shape == (B * NP, 3) and out.dtype == jnp.float32
    assert bool(jnp.all(jnp.abs(out) <= 0.05 + 1e-6))      # 0.05 * tanh bound
    print("KERNEL_OK")
</pallas_src>

<mosaic_0001>
module attributes {stable_mosaic.version = 11 : i64} {
  func.func @_deformer_mlp_kernel(%arg0: i32, %arg1: memref<3x256xf32, #tpu.memory_space<vmem>>, %arg2: memref<32x40xf32, #tpu.memory_space<vmem>>, %arg3: memref<32x32xf32, #tpu.memory_space<vmem>>, %arg4: memref<32x1xf32, #tpu.memory_space<vmem>>, %arg5: memref<3x32xf32, #tpu.memory_space<vmem>>, %arg6: memref<3x1xf32, #tpu.memory_space<vmem>>, %arg7: memref<3x256xf32, #tpu.memory_space<vmem>>, %arg8: memref<40x256xf32, #tpu.memory_space<vmem>>) attributes {dimension_semantics = [#tpu.dimension_semantics<parallel>], iteration_bounds = array<i64: 2>, scalar_prefetch = 0 : i64, scratch_operands = 1 : i64, tpu.core_type = #tpu.core_type<tc>, window_params = [{transform_indices = @transform_0, window_bounds = array<i64: 3, 256>}, {pipeline_mode = #tpu.pipeline_mode<synchronous>, transform_indices = @transform_1, window_bounds = array<i64: 32, 40>}, {pipeline_mode = #tpu.pipeline_mode<synchronous>, transform_indices = @transform_2, window_bounds = array<i64: 32, 32>}, {pipeline_mode = #tpu.pipeline_mode<synchronous>, transform_indices = @transform_3, window_bounds = array<i64: 32, 1>}, {pipeline_mode = #tpu.pipeline_mode<synchronous>, transform_indices = @transform_4, window_bounds = array<i64: 3, 32>}, {pipeline_mode = #tpu.pipeline_mode<synchronous>, transform_indices = @transform_5, window_bounds = array<i64: 3, 1>}, {transform_indices = @transform_6, window_bounds = array<i64: 3, 256>}]} {
    %c0 = arith.constant 0 : index
    %c0_0 = arith.constant 0 : index
    %0 = vector.load %arg1[%c0, %c0_0] : memref<3x256xf32, #tpu.memory_space<vmem>>, vector<3x256xf32>
    %c0_1 = arith.constant 0 : index
    %c0_2 = arith.constant 0 : index
    %1 = vector.load %arg8[%c0_1, %c0_2] : memref<40x256xf32, #tpu.memory_space<vmem>>, vector<3x256xf32>
    tpu.vector_store %arg8[%c0_1, %c0_2], %0 {strides = array<i32>} : memref<40x256xf32, #tpu.memory_space<vmem>>, vector<3x256xf32>,
    %2 = math.sin %0 : vector<3x256xf32>
    %3 = math.cos %0 : vector<3x256xf32>
    %c3 = arith.constant 3 : index
    %c0_3 = arith.constant 0 : index
    %4 = vector.load %arg8[%c3, %c0_3] : memref<40x256xf32, #tpu.memory_space<vmem>>, vector<3x256xf32>
    tpu.vector_store %arg8[%c3, %c0_3], %2 {strides = array<i32>} : memref<40x256xf32, #tpu.memory_space<vmem>>, vector<3x256xf32>,
    %c6 = arith.constant 6 : index
    %c0_4 = arith.constant 0 : index
    %5 = vector.load %arg8[%c6, %c0_4] : memref<40x256xf32, #tpu.memory_space<vmem>>, vector<3x256xf32>
    tpu.vector_store %arg8[%c6, %c0_4], %3 {strides = array<i32>} : memref<40x256xf32, #tpu.memory_space<vmem>>, vector<3x256xf32>,
    %cst = arith.constant 2.000000e+00 : f32
    %6 = vector.broadcast %cst : f32 to vector<3x256xf32>
    %7 = arith.mulf %6, %2 : vector<3x256xf32>
    %8 = arith.mulf %7, %3 : vector<3x256xf32>
    %cst_5 = arith.constant 2.000000e+00 : f32
    %9 = vector.broadcast %cst_5 : f32 to vector<3x256xf32>
    %10 = arith.mulf %9, %2 : vector<3x256xf32>
    %11 = arith.mulf %10, %2 : vector<3x256xf32>
    %cst_6 = arith.constant 1.000000e+00 : f32
    %12 = vector.broadcast %cst_6 : f32 to vector<3x256xf32>
    %13 = arith.subf %12, %11 : vector<3x256xf32>
    %c9 = arith.constant 9 : index
    %c0_7 = arith.constant 0 : index
    %14 = vector.load %arg8[%c9, %c0_7] : memref<40x256xf32, #tpu.memory_space<vmem>>, vector<3x256xf32>
    tpu.vector_store %arg8[%c9, %c0_7], %8 {strides = array<i32>} : memref<40x256xf32, #tpu.memory_space<vmem>>, vector<3x256xf32>,
    %c12 = arith.constant 12 : index
    %c0_8 = arith.constant 0 : index
    %15 = vector.load %arg8[%c12, %c0_8] : memref<40x256xf32, #tpu.memory_space<vmem>>, vector<3x256xf32>
    tpu.vector_store %arg8[%c12, %c0_8], %13 {strides = array<i32>} : memref<40x256xf32, #tpu.memory_space<vmem>>, vector<3x256xf32>,
    %cst_9 = arith.constant 2.000000e+00 : f32
    %16 = vector.broadcast %cst_9 : f32 to vector<3x256xf32>
    %17 = arith.mulf %16, %8 : vector<3x256xf32>
    %18 = arith.mulf %17, %13 : vector<3x256xf32>
    %cst_10 = arith.constant 2.000000e+00 : f32
    %19 = vector.broadcast %cst_10 : f32 to vector<3x256xf32>
    %20 = arith.mulf %19, %8 : vector<3x256xf32>
    %21 = arith.mulf %20, %8 : vector<3x256xf32>
    %cst_11 = arith.constant 1.000000e+00 : f32
    %22 = vector.broadcast %cst_11 : f32 to vector<3x256xf32>
    %23 = arith.subf %22, %21 : vector<3x256xf32>
    %c15 = arith.constant 15 : index
    %c0_12 = arith.constant 0 : index
    %24 = vector.load %arg8[%c15, %c0_12] : memref<40x256xf32, #tpu.memory_space<vmem>>, vector<3x256xf32>
    tpu.vector_store %arg8[%c15, %c0_12], %18 {strides = array<i32>} : memref<40x256xf32, #tpu.memory_space<vmem>>, vector<3x256xf32>,
    %c18 = arith.constant 18 : index
    %c0_13 = arith.constant 0 : index
    %25 = vector.load %arg8[%c18, %c0_13] : memref<40x256xf32, #tpu.memory_space<vmem>>, vector<3x256xf32>
    tpu.vector_store %arg8[%c18, %c0_13], %23 {strides = array<i32>} : memref<40x256xf32, #tpu.memory_space<vmem>>, vector<3x256xf32>,
    %cst_14 = arith.constant 2.000000e+00 : f32
    %26 = vector.broadcast %cst_14 : f32 to vector<3x256xf32>
    %27 = arith.mulf %26, %18 : vector<3x256xf32>
    %28 = arith.mulf %27, %23 : vector<3x256xf32>
    %cst_15 = arith.constant 2.000000e+00 : f32
    %29 = vector.broadcast %cst_15 : f32 to vector<3x256xf32>
    %30 = arith.mulf %29, %18 : vector<3x256xf32>
    %31 = arith.mulf %30, %18 : vector<3x256xf32>
    %cst_16 = arith.constant 1.000000e+00 : f32
    %32 = vector.broadcast %cst_16 : f32 to vector<3x256xf32>
    %33 = arith.subf %32, %31 : vector<3x256xf32>
    %c21 = arith.constant 21 : index
    %c0_17 = arith.constant 0 : index
    %34 = vector.load %arg8[%c21, %c0_17] : memref<40x256xf32, #tpu.memory_space<vmem>>, vector<3x256xf32>
    tpu.vector_store %arg8[%c21, %c0_17], %28 {strides = array<i32>} : memref<40x256xf32, #tpu.memory_space<vmem>>, vector<3x256xf32>,
    %c24 = arith.constant 24 : index
    %c0_18 = arith.constant 0 : index
    %35 = vector.load %arg8[%c24, %c0_18] : memref<40x256xf32, #tpu.memory_space<vmem>>, vector<3x256xf32>
    tpu.vector_store %arg8[%c24, %c0_18], %33 {strides = array<i32>} : memref<40x256xf32, #tpu.memory_space<vmem>>, vector<3x256xf32>,
    %cst_19 = arith.constant 2.000000e+00 : f32
    %36 = vector.broadcast %cst_19 : f32 to vector<3x256xf32>
    %37 = arith.mulf %36, %28 : vector<3x256xf32>
    %38 = arith.mulf %37, %33 : vector<3x256xf32>
    %cst_20 = arith.constant 2.000000e+00 : f32
    %39 = vector.broadcast %cst_20 : f32 to vector<3x256xf32>
    %40 = arith.mulf %39, %28 : vector<3x256xf32>
    %41 = arith.mulf %40, %28 : vector<3x256xf32>
    %cst_21 = arith.constant 1.000000e+00 : f32
    %42 = vector.broadcast %cst_21 : f32 to vector<3x256xf32>
    %43 = arith.subf %42, %41 : vector<3x256xf32>
    %c27 = arith.constant 27 : index
    %c0_22 = arith.constant 0 : index
    %44 = vector.load %arg8[%c27, %c0_22] : memref<40x256xf32, #tpu.memory_space<vmem>>, vector<3x256xf32>
    tpu.vector_store %arg8[%c27, %c0_22], %38 {strides = array<i32>} : memref<40x256xf32, #tpu.memory_space<vmem>>, vector<3x256xf32>,
    %c30 = arith.constant 30 : index
    %c0_23 = arith.constant 0 : index
    %45 = vector.load %arg8[%c30, %c0_23] : memref<40x256xf32, #tpu.memory_space<vmem>>, vector<3x256xf32>
    tpu.vector_store %arg8[%c30, %c0_23], %43 {strides = array<i32>} : memref<40x256xf32, #tpu.memory_space<vmem>>, vector<3x256xf32>,
    %cst_24 = arith.constant 2.000000e+00 : f32
    %46 = vector.broadcast %cst_24 : f32 to vector<3x256xf32>
    %47 = arith.mulf %46, %38 : vector<3x256xf32>
    %48 = arith.mulf %47, %43 : vector<3x256xf32>
    %cst_25 = arith.constant 2.000000e+00 : f32
    %49 = vector.broadcast %cst_25 : f32 to vector<3x256xf32>
    %50 = arith.mulf %49, %38 : vector<3x256xf32>
    %51 = arith.mulf %50, %38 : vector<3x256xf32>
    %cst_26 = arith.constant 1.000000e+00 : f32
    %52 = vector.broadcast %cst_26 : f32 to vector<3x256xf32>
    %53 = arith.subf %52, %51 : vector<3x256xf32>
    %c33 = arith.constant 33 : index
    %c0_27 = arith.constant 0 : index
    %54 = vector.load %arg8[%c33, %c0_27] : memref<40x256xf32, #tpu.memory_space<vmem>>, vector<3x256xf32>
    tpu.vector_store %arg8[%c33, %c0_27], %48 {strides = array<i32>} : memref<40x256xf32, #tpu.memory_space<vmem>>, vector<3x256xf32>,
    %c36 = arith.constant 36 : index
    %c0_28 = arith.constant 0 : index
    %55 = vector.load %arg8[%c36, %c0_28] : memref<40x256xf32, #tpu.memory_space<vmem>>, vector<3x256xf32>
    tpu.vector_store %arg8[%c36, %c0_28], %53 {strides = array<i32>} : memref<40x256xf32, #tpu.memory_space<vmem>>, vector<3x256xf32>,
    %cst_29 = arith.constant 1.000000e+00 : f32
    %56 = vector.broadcast %cst_29 : f32 to vector<1x256xf32>
    %c39 = arith.constant 39 : index
    %c0_30 = arith.constant 0 : index
    %57 = vector.load %arg8[%c39, %c0_30] : memref<40x256xf32, #tpu.memory_space<vmem>>, vector<1x256xf32>
    tpu.vector_store %arg8[%c39, %c0_30], %56 {strides = array<i32>} : memref<40x256xf32, #tpu.memory_space<vmem>>, vector<1x256xf32>,
    %c0_31 = arith.constant 0 : index
    %c0_32 = arith.constant 0 : index
    %58 = vector.load %arg8[%c0_31, %c0_32] : memref<40x256xf32, #tpu.memory_space<vmem>>, vector<40x256xf32>
    %c0_33 = arith.constant 0 : index
    %c0_34 = arith.constant 0 : index
    %59 = vector.load %arg2[%c0_33, %c0_34] : memref<32x40xf32, #tpu.memory_space<vmem>>, vector<32x40xf32>
    %cst_35 = arith.constant dense<0.000000e+00> : vector<32x256xf32>
    %60 = tpu.matmul %59, %58, %cst_35 {dimension_numbers = #tpu.dot_dimension_numbers<[1], [0], [0], [1], [0, 0, 1, 1], [], []>} : vector<32x40xf32>, vector<40x256xf32>, vector<32x256xf32> -> vector<32x256xf32>
    %cst_36 = arith.constant 0.000000e+00 : f32
    %61 = vector.broadcast %cst_36 : f32 to vector<32x256xf32>
    %62 = arith.maximumf %60, %61 : vector<32x256xf32>
    %63 = vector.broadcast %cst_36 : f32 to vector<32x256xf32>
    %64 = arith.subf %60, %63 : vector<32x256xf32>
    %65 = arith.cmpf one, %64, %64 : vector<32x256xf32>
    %66 = vector.broadcast %cst_36 : f32 to vector<32x256xf32>
    %67 = arith.addf %60, %66 : vector<32x256xf32>
    %68 = math.absf %64 : vector<32x256xf32>
    %cst_37 = arith.constant 0.000000e+00 : f32
    %69 = vector.broadcast %cst_37 : f32 to vector<32x256xf32>
    %70 = arith.subf %69, %68 : vector<32x256xf32>
    %71 = math.exp %70 : vector<32x256xf32>
    %72 = math.log1p %71 : vector<32x256xf32>
    %73 = arith.addf %62, %72 : vector<32x256xf32>
    %74 = arith.select %65, %67, %73 : vector<32x256xi1>, vector<32x256xf32>
    %c0_38 = arith.constant 0 : index
    %c0_39 = arith.constant 0 : index
    %75 = vector.load %arg3[%c0_38, %c0_39] : memref<32x32xf32, #tpu.memory_space<vmem>>, vector<32x32xf32>
    %cst_40 = arith.constant dense<0.000000e+00> : vector<32x256xf32>
    %76 = tpu.matmul %75, %74, %cst_40 {dimension_numbers = #tpu.dot_dimension_numbers<[1], [0], [0], [1], [0, 0, 1, 1], [], []>} : vector<32x32xf32>, vector<32x256xf32>, vector<32x256xf32> -> vector<32x256xf32>
    %c0_41 = arith.constant 0 : index
    %c0_42 = arith.constant 0 : index
    %77 = vector.load %arg4[%c0_41, %c0_42] : memref<32x1xf32, #tpu.memory_space<vmem>>, vector<32x1xf32>
    %78 = vector.broadcast %77 : vector<32x1xf32> to vector<32x256xf32>
    %79 = arith.addf %76, %78 : vector<32x256xf32>
    %cst_43 = arith.constant 0.000000e+00 : f32
    %80 = vector.broadcast %cst_43 : f32 to vector<32x256xf32>
    %81 = arith.maximumf %79, %80 : vector<32x256xf32>
    %82 = vector.broadcast %cst_43 : f32 to vector<32x256xf32>
    %83 = arith.subf %79, %82 : vector<32x256xf32>
    %84 = arith.cmpf one, %83, %83 : vector<32x256xf32>
    %85 = vector.broadcast %cst_43 : f32 to vector<32x256xf32>
    %86 = arith.addf %79, %85 : vector<32x256xf32>
    %87 = math.absf %83 : vector<32x256xf32>
    %cst_44 = arith.constant 0.000000e+00 : f32
    %88 = vector.broadcast %cst_44 : f32 to vector<32x256xf32>
    %89 = arith.subf %88, %87 : vector<32x256xf32>
    %90 = math.exp %89 : vector<32x256xf32>
    %91 = math.log1p %90 : vector<32x256xf32>
    %92 = arith.addf %81, %91 : vector<32x256xf32>
    %93 = arith.select %84, %86, %92 : vector<32x256xi1>, vector<32x256xf32>
    %c0_45 = arith.constant 0 : index
    %c0_46 = arith.constant 0 : index
    %94 = vector.load %arg5[%c0_45, %c0_46] : memref<3x32xf32, #tpu.memory_space<vmem>>, vector<3x32xf32>
    %cst_47 = arith.constant dense<0.000000e+00> : vector<3x256xf32>
    %95 = tpu.matmul %94, %93, %cst_47 {dimension_numbers = #tpu.dot_dimension_numbers<[1], [0], [0], [1], [0, 0, 1, 1], [], []>} : vector<3x32xf32>, vector<32x256xf32>, vector<3x256xf32> -> vector<3x256xf32>
    %c0_48 = arith.constant 0 : index
    %c0_49 = arith.constant 0 : index
    %96 = vector.load %arg6[%c0_48, %c0_49] : memref<3x1xf32, #tpu.memory_space<vmem>>, vector<3x1xf32>
    %97 = vector.broadcast %96 : vector<3x1xf32> to vector<3x256xf32>
    %98 = arith.addf %95, %97 : vector<3x256xf32>
    %99 = math.tanh %98 : vector<3x256xf32>
    %cst_50 = arith.constant 5.000000e-02 : f32
    %100 = vector.broadcast %cst_50 : f32 to vector<3x256xf32>
    %101 = arith.mulf %100, %99 : vector<3x256xf32>
    %c0_51 = arith.constant 0 : index
    %c0_52 = arith.constant 0 : index
    %102 = vector.load %arg7[%c0_51, %c0_52] : memref<3x256xf32, #tpu.memory_space<vmem>>, vector<3x256xf32>
    tpu.vector_store %arg7[%c0_51, %c0_52], %101 {strides = array<i32>} : memref<3x256xf32, #tpu.memory_space<vmem>>, vector<3x256xf32>,
    return
  }
  func.func @transform_0(%arg0: i32) -> (i32, i32) {
    %c0_i32 = arith.constant 0 : i32
    %c0_i32_0 = arith.constant 0 : i32
    return %c0_i32, %arg0 : i32, i32
  }
  func.func @transform_1(%arg0: i32) -> (i32, i32) {
    %c0_i32 = arith.constant 0 : i32
    %c0_i32_0 = arith.constant 0 : i32
    %c0_i32_1 = arith.constant 0 : i32
    return %c0_i32, %c0_i32_0 : i32, i32
  }
  func.func @transform_2(%arg0: i32) -> (i32, i32) {
    %c0_i32 = arith.constant 0 : i32
    %c0_i32_0 = arith.constant 0 : i32
    %c0_i32_1 = arith.constant 0 : i32
    return %c0_i32, %c0_i32_0 : i32, i32
  }
  func.func @transform_3(%arg0: i32) -> (i32, i32) {
    %c0_i32 = arith.constant 0 : i32
    %c0_i32_0 = arith.constant 0 : i32
    %c0_i32_1 = arith.constant 0 : i32
    return %c0_i32, %c0_i32_0 : i32, i32
  }
  func.func @transform_4(%arg0: i32) -> (i32, i32) {
    %c0_i32 = arith.constant 0 : i32
    %c0_i32_0 = arith.constant 0 : i32
    %c0_i32_1 = arith.constant 0 : i32
    return %c0_i32, %c0_i32_0 : i32, i32
  }
  func.func @transform_5(%arg0: i32) -> (i32, i32) {
    %c0_i32 = arith.constant 0 : i32
    %c0_i32_0 = arith.constant 0 : i32
    %c0_i32_1 = arith.constant 0 : i32
    return %c0_i32, %c0_i32_0 : i32, i32
  }
  func.func @transform_6(%arg0: i32) -> (i32, i32) {
    %c0_i32 = arith.constant 0 : i32
    %c0_i32_0 = arith.constant 0 : i32
    return %c0_i32, %arg0 : i32, i32
  }
}

</mosaic_0001>

<llo_original>
// kernel: tpu_custom_call.1
$region0: #{tpu_custom_call.1}
  #allocation0 [shape = 'u32[]', space=smem, size = 0x4, offset = 0x4, fixed_abs, tag = 'smem constant byte address 0x4 - core index']
  #allocation1 [shape = 'u32[144,128]{1,0:T(1,128)}', space=vmem, size = 0x12000, scoped, tag = 'internal scratch']
  #allocation2 [shape = 'f32[40,256]{1,0:T(8,128)}', space=vmem, size = 0xa000, scoped, tag = 'scratch operand']
  %s0 = inlined_call_operand.hbm [shape: f32[3,512], index: 0, kind: input, shape index: {}]
  %s1 = inlined_call_operand.vmem [shape: f32[32,40], index: 1, kind: input, shape index: {}]
  %s2 = inlined_call_operand.hbm [shape: f32[32,32], index: 2, kind: input, shape index: {}]
  %s3 = inlined_call_operand.vmem [shape: f32[32,1], index: 3, kind: input, shape index: {}]
  %s4 = inlined_call_operand.vmem [shape: f32[3,32], index: 4, kind: input, shape index: {}]
  %s5 = inlined_call_operand.vmem [shape: f32[3,1], index: 5, kind: input, shape index: {}]
  %s6 = inlined_call_operand.hbm [shape: f32[3,512], index: 6, kind: output, shape index: {}]
  %s7 = sld [smem:[#allocation0]]
  $region65: #{tpu_custom_call.1} parent=0
    _
  %s9 = ssub.s32 1, %s7
  %s10 = scalar_select 0, %s9, %s7
  $region1: #{tpu_custom_call.1} parent=0
    #allocation3 [shape = 'u8[8192]{0}', space=vmem, size = 0x2000, scoped, tag = 'input window, operand 0']
    #allocation4 [shape = 's32[2]{0}', space=sflag, size = 0x8, scoped, tag = 'scoped memory for tpu_custom_call.1']
    #allocation5 [shape = 's32[2]{0}', space=sflag, size = 0x8, scoped, tag = 'scoped memory for tpu_custom_call.1']
    #allocation6 [shape = 'u8[16384]{0}', space=vmem, size = 0x4000, scoped, tag = 'input window, operand 2, single buffered']
    #allocation7 [shape = 's32[1]{0}', space=sflag, size = 0x4, scoped, tag = 'scoped memory for tpu_custom_call.1']
    #allocation8 [shape = 'u8[8192]{0}', space=vmem, size = 0x2000, scoped, tag = 'output window, operand 0']
    %11 = vsyncpa [#allocation4], 0
    %s12 = scalar_lea.sflag [#allocation4], 1
    %13 = vsyncpa %s12, 0
    %14 = vsyncpa [#allocation7], 0
    %15 = vsyncpa [#allocation5], 0
    %s16 = scalar_lea.sflag [#allocation5], 1
    %17 = vsyncpa %s16, 0
    loop: start=0, step=1, limit=4
    $region2: #{tpu_custom_call.1} parent=1 // loop_pre_header
      _
    $region3: #{tpu_custom_call.1} parent=1 // loop_header
      %s19 = sphi 0, %s23
      %p20 = scmp.ge.s32.totalorder %s19, 4
      %s29 = sphi 0, %s31
      %s32 = sphi 0, %s29
      %s33 = sphi 0, %s32
      %s49 = sphi 0, %s33
      %s53 = sphi 0, %s53
      %s55 = sphi 0, %s53
      %s56 = sphi 0, %s55
      %s70 = sphi 0, %s56
      %s74 = sphi 0, %s74
      %s76 = sphi 0, %s74
      %s77 = sphi 0, %s76
      %s91 = sphi 0, %s77
      %s95 = sphi 0, %s95
      %s97 = sphi 0, %s95
      %s98 = sphi 0, %s97
      %s112 = sphi 0, %s98
      %s116 = sphi 0, %s116
      %s118 = sphi 0, %s116
      %s119 = sphi 0, %s118
      %s133 = sphi 0, %s119
      %s137 = sphi 0, %s137
      %s139 = sphi 0, %s137
      %s140 = sphi 0, %s139
      %s154 = sphi 0, %s140
      %s160 = sphi 0, %s162
      %s163 = sphi 0, %s160
      %s164 = sphi 0, %s163
      %s180 = sphi 0, %s164
    $region4: #{tpu_custom_call.1} parent=1 // loop_header_branch
      %22 = sbr.rel (%p20) target = $region8
    $region5: #{tpu_custom_call.1} parent=1 // loop_body
      %s24 = ssub.s32 %s19, 1
      %s25 = ssub.s32 %s19, 2
      %s26 = sadd.s32 %s19, 1
      %s27 = ssub.s32 %s19, %s26
      %p28 = scmp.eq.s32.totalorder %s27, 0
      %s30 = sadd.s32 %s29, 1
      %s31 = scalar_select %p28, %s29, %s30
      %p34 = pneg %p28
      %p35 = scmp.eq.s32.totalorder %s19, 1
      %p36 = por %p34, %p35
      %p37 = scmp.ne.s32.totalorder %s29, %s32
      %p38 = scmp.eq.s32.totalorder %s19, 0
      %p39 = por %p37, %p38
      %p40 = scmp.ne.s32.totalorder %s29, %s32
      %p41 = scmp.eq.s32.totalorder %s24, 1
      %p42 = por %p40, %p41
      %p43 = scmp.ne.s32.totalorder %s32, %s33
      %p44 = scmp.eq.s32.totalorder %s24, 0
      %p45 = por %p43, %p44
      %p46 = scmp.ne.s32.totalorder %s32, %s33
      %p47 = scmp.eq.s32.totalorder %s25, 1
      %p48 = por %p46, %p47
      %p50 = scmp.ne.s32.totalorder %s33, %s49
      %p51 = scmp.eq.s32.totalorder %s25, 0
      %p52 = por %p50, %p51
      %s54 = sadd.s32 %s53, 1
      %p57 = scmp.eq.s32.totalorder %s19, 1
      %p58 = scmp.ne.s32.totalorder %s53, %s55
      %p59 = scmp.eq.s32.totalorder %s19, 0
      %p60 = por %p58, %p59
      %p61 = scmp.ne.s32.totalorder %s53, %s55
      %p62 = scmp.eq.s32.totalorder %s24, 1
      %p63 = por %p61, %p62
      %p64 = scmp.ne.s32.totalorder %s55, %s56
      %p65 = scmp.eq.s32.totalorder %s24, 0
      %p66 = por %p64, %p65
      %p67 = scmp.ne.s32.totalorder %s55, %s56
      %p68 = scmp.eq.s32.totalorder %s25, 1
      %p69 = por %p67, %p68
      %p71 = scmp.ne.s32.totalorder %s56, %s70
      %p72 = scmp.eq.s32.totalorder %s25, 0
      %p73 = por %p71, %p72
      %s75 = sadd.s32 %s74, 1
      %p78 = scmp.eq.s32.totalorder %s19, 1
      %p79 = scmp.ne.s32.totalorder %s74, %s76
      %p80 = scmp.eq.s32.totalorder %s19, 0
      %p81 = por %p79, %p80
      %p82 = scmp.ne.s32.totalorder %s74, %s76
      %p83 = scmp.eq.s32.totalorder %s24, 1
      %p84 = por %p82, %p83
      %p85 = scmp.ne.s32.totalorder %s76, %s77
      %p86 = scmp.eq.s32.totalorder %s24, 0
      %p87 = por %p85, %p86
      %p88 = scmp.ne.s32.totalorder %s76, %s77
      %p89 = scmp.eq.s32.totalorder %s25, 1
      %p90 = por %p88, %p89
      %p92 = scmp.ne.s32.totalorder %s77, %s91
      %p93 = scmp.eq.s32.totalorder %s25, 0
      %p94 = por %p92, %p93
      %s96 = sadd.s32 %s95, 1
      %p99 = scmp.eq.s32.totalorder %s19, 1
      %p100 = scmp.ne.s32.totalorder %s95, %s97
      %p101 = scmp.eq.s32.totalorder %s19, 0
      %p102 = por %p100, %p101
      %p103 = scmp.ne.s32.totalorder %s95, %s97
      %p104 = scmp.eq.s32.totalorder %s24, 1
      %p105 = por %p103, %p104
      %p106 = scmp.ne.s32.totalorder %s97, %s98
      %p107 = scmp.eq.s32.totalorder %s24, 0
      %p108 = por %p106, %p107
      %p109 = scmp.ne.s32.totalorder %s97, %s98
      %p110 = scmp.eq.s32.totalorder %s25, 1
      %p111 = por %p109, %p110
      %p113 = scmp.ne.s32.totalorder %s98, %s112
      %p114 = scmp.eq.s32.totalorder %s25, 0
      %p115 = por %p113, %p114
      %s117 = sadd.s32 %s116, 1
      %p120 = scmp.eq.s32.totalorder %s19, 1
      %p121 = scmp.ne.s32.totalorder %s116, %s118
      %p122 = scmp.eq.s32.totalorder %s19, 0
      %p123 = por %p121, %p122
      %p124 = scmp.ne.s32.totalorder %s116, %s118
      %p125 = scmp.eq.s32.totalorder %s24, 1
      %p126 = por %p124, %p125
      %p127 = scmp.ne.s32.totalorder %s118, %s119
      %p128 = scmp.eq.s32.totalorder %s24, 0
      %p129 = por %p127, %p128
      %p130 = scmp.ne.s32.totalorder %s118, %s119
      %p131 = scmp.eq.s32.totalorder %s25, 1
      %p132 = por %p130, %p131
      %p134 = scmp.ne.s32.totalorder %s119, %s133
      %p135 = scmp.eq.s32.totalorder %s25, 0
      %p136 = por %p134, %p135
      %s138 = sadd.s32 %s137, 1
      %p141 = scmp.eq.s32.totalorder %s19, 1
      %p142 = scmp.ne.s32.totalorder %s137, %s139
      %p143 = scmp.eq.s32.totalorder %s19, 0
      %p144 = por %p142, %p143
      %p145 = scmp.ne.s32.totalorder %s137, %s139
      %p146 = scmp.eq.s32.totalorder %s24, 1
      %p147 = por %p145, %p146
      %p148 = scmp.ne.s32.totalorder %s139, %s140
      %p149 = scmp.eq.s32.totalorder %s24, 0
      %p150 = por %p148, %p149
      %p151 = scmp.ne.s32.totalorder %s139, %s140
      %p152 = scmp.eq.s32.totalorder %s25, 1
      %p153 = por %p151, %p152
      %p155 = scmp.ne.s32.totalorder %s140, %s154
      %p156 = scmp.eq.s32.totalorder %s25, 0
      %p157 = por %p155, %p156
      %s158 = ssub.s32 %s19, %s26
      %p159 = scmp.eq.s32.totalorder %s158, 0
      %s161 = sadd.s32 %s160, 1
      %s162 = scalar_select %p159, %s160, %s161
      %p165 = pneg %p159
      %p166 = scmp.eq.s32.totalorder %s19, 1
      %p167 = por %p165, %p166
      %p168 = scmp.ne.s32.totalorder %s160, %s163
      %p169 = scmp.eq.s32.totalorder %s19, 0
      %p170 = por %p168, %p169
      %p171 = scmp.ne.s32.totalorder %s160, %s163
      %p172 = scmp.eq.s32.totalorder %s24, 1
      %p173 = por %p171, %p172
      %p174 = scmp.ne.s32.totalorder %s163, %s164
      %p175 = scmp.eq.s32.totalorder %s24, 0
      %p176 = por %p174, %p175
      %p177 = scmp.ne.s32.totalorder %s163, %s164
      %p178 = scmp.eq.s32.totalorder %s25, 1
      %p179 = por %p177, %p178
      %p181 = scmp.ne.s32.totalorder %s164, %s180
      %p182 = scmp.eq.s32.totalorder %s25, 0
      %p183 = por %p181, %p182
      %p184 = scmp.le.s32.totalorder 1, %s19
      %p185 = scmp.lt.s32.totalorder %s19, 3
      %p186 = pnand %p184, %p185
      %p187 = pneg %p186
      // Predicated region
      $region9: #{tpu_custom_call.1} parent=5 // pred_check
        _
      $region10: #{tpu_custom_call.1} parent=5 // pred_check_branch
        %189 = sbr.rel (%p186) target = $region12
      $region11: #{tpu_custom_call.1} parent=5 // pred_region
        %s190 = ssub.s32 %s19, 1
        // Predicated region
        $region13: #{tpu_custom_call.1} parent=11 // pred_check
          %p191 = pneg %p66
        $region14: #{tpu_custom_call.1} parent=11 // pred_check_branch
          %193 = sbr.rel (%p191) target = $region16
        $region15: #{tpu_custom_call.1} parent=11 // pred_region
          _
        $region16: #{tpu_custom_call.1} parent=11 // pred_fallthru
          _
        // Predicated region
        $region17: #{tpu_custom_call.1} parent=11 // pred_check
          %p194 = pneg %p87
        $region18: #{tpu_custom_call.1} parent=11 // pred_check_branch
          %196 = sbr.rel (%p194) target = $region20
        $region19: #{tpu_custom_call.1} parent=11 // pred_region
          %s198 = ssub.s32 512, 512
          %199 = vsyncadd [#allocation7], %s198
          %s200 = sshll.u32 [#allocation6], 4
          %s201 = int_to_ptr.vmem [resolvable:$true] %s200
          %206 = dma.hbm_to_vmem [thread:$0]  %s2, 512, %s201, [#allocation7], 128, 128, 8
        $region20: #{tpu_custom_call.1} parent=11 // pred_fallthru
          _
        // Predicated region
        $region21: #{tpu_custom_call.1} parent=11 // pred_check
          %p207 = pneg %p108
        $region22: #{tpu_custom_call.1} parent=11 // pred_check_branch
          %209 = sbr.rel (%p207) target = $region24
        $region23: #{tpu_custom_call.1} parent=11 // pred_region
          _
        $region24: #{tpu_custom_call.1} parent=11 // pred_fallthru
          _
        // Predicated region
        $region25: #{tpu_custom_call.1} parent=11 // pred_check
          %p210 = pneg %p129
        $region26: #{tpu_custom_call.1} parent=11 // pred_check_branch
          %212 = sbr.rel (%p210) target = $region28
        $region27: #{tpu_custom_call.1} parent=11 // pred_region
          _
        $region28: #{tpu_custom_call.1} parent=11 // pred_fallthru
          _
        // Predicated region
        $region29: #{tpu_custom_call.1} parent=11 // pred_check
          %p213 = pneg %p150
        $region30: #{tpu_custom_call.1} parent=11 // pred_check_branch
          %215 = sbr.rel (%p213) target = $region32
        $region31: #{tpu_custom_call.1} parent=11 // pred_region
          _
        $region32: #{tpu_custom_call.1} parent=11 // pred_fallthru
          _
      $region12: #{tpu_custom_call.1} parent=5 // pred_fallthru
        _
      %p216 = scmp.lt.s32.totalorder %s19, 2
      // Predicated region
      $region33: #{tpu_custom_call.1} parent=5 // pred_check
        %p217 = pneg %p216
      $region34: #{tpu_custom_call.1} parent=5 // pred_check_branch
        %219 = sbr.rel (%p217) target = $region36
      $region35: #{tpu_custom_call.1} parent=5 // pred_region
        // Predicated region
        $region37: #{tpu_custom_call.1} parent=35 // pred_check
          %p220 = pneg %p39
        $region38: #{tpu_custom_call.1} parent=35 // pred_check_branch
          %222 = sbr.rel (%p220) target = $region40
        $region39: #{tpu_custom_call.1} parent=35 // pred_region
          %s223 = sand.u32 %s29, 1
          %s224 = scalar_lea.sflag [#allocation4], %s223
          %s225 = sand.u32 %s29, 1
          %s226 = smul.addr %s225, 8
          %s227 = scalar_lea.vmem [#allocation3], %s226
          %s228 = smul.u32 2, %s19
          %s230 = ssub.s32 128, 128
          %231 = vsyncadd %s224, %s230
          %s232 = smul.addr %s228, 64
          %s233 = scalar_lea.hbm %s0, %s232
          %s235 = sshll.u32 %s227, 4
          %s236 = int_to_ptr.vmem [resolvable:$true] %s235
          %238 = dma.hbm_to_vmem [thread:$0]  %s233, 128, %s236, %s224
        $region40: #{tpu_custom_call.1} parent=35 // pred_fallthru
          _
      $region36: #{tpu_custom_call.1} parent=5 // pred_fallthru
        _
      %p239 = scmp.le.s32.totalorder 1, %s19
      %p240 = scmp.lt.s32.totalorder %s19, 3
      %p241 = pnand %p239, %p240
      %p242 = pneg %p241
      // Predicated region
      $region41: #{tpu_custom_call.1} parent=5 // pred_check
        _
      $region42: #{tpu_custom_call.1} parent=5 // pred_check_branch
        %244 = sbr.rel (%p241) target = $region44
      $region43: #{tpu_custom_call.1} parent=5 // pred_region
        %s245 = ssub.s32 %s19, 1
        %s246 = sand.u32 %s32, 1
        %s247 = scalar_lea.sflag [#allocation4], %s246
        %s248 = sand.u32 %s32, 1
        %s249 = smul.addr %s248, 8
        %s250 = scalar_lea.vmem [#allocation3], %s249
        // Predicated region
        $region45: #{tpu_custom_call.1} parent=43 // pred_check
          %p251 = pneg %p45
        $region46: #{tpu_custom_call.1} parent=43 // pred_check_branch
          %253 = sbr.rel (%p251) target = $region48
        $region47: #{tpu_custom_call.1} parent=43 // pred_region
          %254 = dma.done %s247, 128
        $region48: #{tpu_custom_call.1} parent=43 // pred_fallthru
          _
        // Predicated region
        $region49: #{tpu_custom_call.1} parent=43 // pred_check
          %p255 = pneg %p87
        $region50: #{tpu_custom_call.1} parent=43 // pred_check_branch
          %257 = sbr.rel (%p255) target = $region52
        $region51: #{tpu_custom_call.1} parent=43 // pred_region
          %258 = dma.done [#allocation7], 512
        $region52: #{tpu_custom_call.1} parent=43 // pred_fallthru
          _
        %s259 = sand.u32 %s32, 1
        %s260 = scalar_lea.sflag [#allocation4], %s259
        %s261 = sand.u32 %s32, 1
        %s262 = smul.addr %s261, 8
        %s263 = scalar_lea.vmem [#allocation3], %s262
        %p264 = pneg %p45
        %p265 = pneg %p42
        %p266 = pneg %p66
        %p267 = pneg %p63
        %p268 = pneg %p87
        %p269 = pneg %p84
        %p270 = pneg %p108
        %p271 = pneg %p105
        %p272 = pneg %p129
        %p273 = pneg %p126
        %p274 = pneg %p150
        %p275 = pneg %p147
        %p276 = pneg %p176
        %p277 = pneg %p173
        %s278 = sand.u32 %s163, 1
        %s279 = scalar_lea.sflag [#allocation5], %s278
        %s280 = sand.u32 %s163, 1
        %s281 = smul.addr %s280, 8
        %s282 = scalar_lea.vmem [#allocation8], %s281
        %s283 = smul.u32 2, %s24
        %s284 = smul.u32 2, %s24
        %v285 = vld [vmem:[%s250] sm:$0x77]
        %v287 = vcombine.high %v285, %v285
        %289 = vst [vmem:[#allocation2] sm:$0x7] %v285
        %290 = vst [vmem:[#allocation2 + $0x8] sm:$0x7] %v287
        %v291 = vand.u32 2147483647, %v285
        %vm292 = vcmp.le.f32.partialorder %v291, 0.7853982
        %vm293 = vcmp.lt.s32.totalorder %v285, 0
        %v294 = vand.u32 %v285, 2139095040
        %v295 = vshrl.u32 %v294, 23
        %v296 = vsub.s32 %v295, 127
        %v297 = vand.u32 2147483647, %v285
        %v298 = vand.u32 %v297, 8388607
        %v299 = vor.u32 %v298, 8388608
        %v300 = vsub.s32 0, %v299
        %v301 = vadd.s32 %v296, 1
        %vm302 = vcmp.gt.s32.totalorder %v301, 0
        %v303 = vsel %vm302, %v301, 0
        %v304 = vshrl.u32 %v303, 5
        %v305 = vand.u32 %v303, 31
        %v306 = vsub.s32 32, %v305
        %v307 = vshrl.u32 683565275, %v306
        %v308 = vshll.u32 683565275, %v305
        %v309 = vshrl.u32 2475754826, %v306
        %v310 = vor.u32 %v308, %v309
        %v311 = vshll.u32 2475754826, %v305
        %v312 = vshrl.u32 2131351028, %v306
        %v313 = vor.u32 %v311, %v312
        %v314 = vshll.u32 2131351028, %v305
        %v315 = vshrl.u32 2102212464, %v306
        %v316 = vor.u32 %v314, %v315
        %v317 = vshll.u32 2102212464, %v305
        %v318 = vshrl.u32 920167782, %v306
        %v319 = vor.u32 %v317, %v318
        %v320 = vshll.u32 920167782, %v305
        %v321 = vshrl.u32 1326507024, %v306
        %v322 = vor.u32 %v320, %v321
        %vm323 = vcmp.lt.s32.totalorder %v304, 1
        %vm324 = vcmp.lt.s32.totalorder %v304, 2
        %vm325 = vcmp.lt.s32.totalorder %v304, 3
        %vm326 = vcmp.lt.s32.totalorder %v304, 4
        %v327 = vsel %vm323, %v307, %v310
        %v328 = vsel %vm326, %v316, 2102212464
        %v329 = vsel %vm325, %v313, %v328
        %v330 = vsel %vm324, %v327, %v329
        %v331 = vsel %vm323, %v310, %v313
        %v332 = vsel %vm326, %v319, 920167782
        %v333 = vsel %vm325, %v316, %v332
        %v334 = vsel %vm324, %v331, %v333
        %v335 = vsel %vm323, %v313, %v316
        %v336 = vsel %vm326, %v322, 1326507024
        %v337 = vsel %vm325, %v319, %v336
        %v338 = vsel %vm324, %v335, %v337
        %v339 = vshll.u32 %v299, 8
        %v340 = vmul.u32.u64.compose %v339, %v338
        %v341 = vextract.low.u32 %v340
        %v342 = vextract.high.u32 %v340
        %v343 = vmul.u32.u64.compose %v339, %v334
        %v344 = vextract.low.u32 %v343
        %v345 = vextract.high.u32 %v343
        %v346 = vmul.u32 %v339, %v330
        %v347 = vadd.s32 %v342, %v344
        %vm348 = vc.u32 %v342, %v344
        %v349 = vadd.s32 %v345, 1
        %v350 = vsel %vm348, %v349, %v345
        %v351 = vadd.s32 %v346, %v350
        %v352 = vadd.s32 %v351, 536870912
        %v353 = vshrl.u32 %v352, 30
        %v354 = vshll.u32 %v353, 30
        %v355 = vsub.s32 %v351, %v354
        %vm356 = vcmp.lt.s32.totalorder %v355, 0
        %v357 = vsub.s32 0, %v355
        %v358 = vsel %vm356, %v357, %v355
        %v359 = vclz %v358
        %v360 = vsub.s32 %v359, 2
        %vm361 = vcmp.gt.s32.totalorder 0, %v360
        %v362 = vsel %vm361, 0, %v360
        %v363 = vsub.s32 32, %v362
        %v364 = vshll.u32 %v355, %v362
        %v365 = vshrl.u32 %v347, %v363
        %v366 = vor.u32 %v364, %v365
        %v367 = vsub.s32 4294967266, %v362
        %v368 = vadd.s32 %v367, 127
        %v369 = vshll.u32 %v368, 23
        %v370 = vor.u32 4788187, %v369
        %v371 = vand.u32 2147483647, %v370
        %v373 = vcvt.s32.f32 %v366
        %v374 = vmul.f32 %v373, %v371
        %v375 = vxor.u32 %v374, 2147483648
        %v376 = vsel %vm293, %v375, %v374
        %v377 = vsub.s32 4, %v353
        %v378 = vsel %vm293, %v377, %v353
        %v379 = vsel %vm292, %v285, %v376
        %v380 = vsel %vm292, 0, %v378
        %v381 = vcosq.f32.pop %v379
        %v382 = vsinq.f32.pop %v379
        %vm383 = vweird.f32 %v285
        %v384 = vadd.s32 %v380, 3
        %v385 = vand.u32 %v384, 3
        %vm386 = vcmp.lt.s32.totalorder %v385, 2
        %vm387 = vcmp.eq.s32.totalorder %v385, 0
        %v388 = vxor.u32 %v382, 2147483648
        %v389 = vsel %vm387, %v381, %v388
        %vm390 = vcmp.eq.s32.totalorder %v385, 2
        %v391 = vxor.u32 %v381, 2147483648
        %v392 = vsel %vm390, %v391, %v382
        %v393 = vsel %vm386, %v389, %v392
        %v394 = vsel %vm383, nan, %v393
        %v395 = vand.u32 2147483647, %v285
        %vm396 = vcmp.le.f32.partialorder %v395, 0.7853982
        %vm397 = vcmp.lt.s32.totalorder %v285, 0
        %v398 = vand.u32 %v285, 2139095040
        %v399 = vshrl.u32 %v398, 23
        %v400 = vsub.s32 %v399, 127
        %v401 = vand.u32 2147483647, %v285
        %v402 = vand.u32 %v401, 8388607
        %v403 = vor.u32 %v402, 8388608
        %v404 = vsub.s32 0, %v403
        %v405 = vadd.s32 %v400, 1
        %vm406 = vcmp.gt.s32.totalorder %v405, 0
        %v407 = vsel %vm406, %v405, 0
        %v408 = vshrl.u32 %v407, 5
        %v409 = vand.u32 %v407, 31
        %v410 = vsub.s32 32, %v409
        %v411 = vshrl.u32 683565275, %v410
        %v412 = vshll.u32 683565275, %v409
        %v413 = vshrl.u32 2475754826, %v410
        %v414 = vor.u32 %v412, %v413
        %v415 = vshll.u32 2475754826, %v409
        %v416 = vshrl.u32 2131351028, %v410
        %v417 = vor.u32 %v415, %v416
        %v418 = vshll.u32 2131351028, %v409
        %v419 = vshrl.u32 2102212464, %v410
        %v420 = vor.u32 %v418, %v419
        %v421 = vshll.u32 2102212464, %v409
        %v422 = vshrl.u32 920167782, %v410
        %v423 = vor.u32 %v421, %v422
        %v424 = vshll.u32 920167782, %v409
        %v425 = vshrl.u32 1326507024, %v410
        %v426 = vor.u32 %v424, %v425
        %vm427 = vcmp.lt.s32.totalorder %v408, 1
        %vm428 = vcmp.lt.s32.totalorder %v408, 2
        %vm429 = vcmp.lt.s32.totalorder %v408, 3
        %vm430 = vcmp.lt.s32.totalorder %v408, 4
        %v431 = vsel %vm427, %v411, %v414
        %v432 = vsel %vm430, %v420, 2102212464
        %v433 = vsel %vm429, %v417, %v432
        %v434 = vsel %vm428, %v431, %v433
        %v435 = vsel %vm427, %v414, %v417
        %v436 = vsel %vm430, %v423, 920167782
        %v437 = vsel %vm429, %v420, %v436
        %v438 = vsel %vm428, %v435, %v437
        %v439 = vsel %vm427, %v417, %v420
        %v440 = vsel %vm430, %v426, 1326507024
        %v441 = vsel %vm429, %v423, %v440
        %v442 = vsel %vm428, %v439, %v441
        %v443 = vshll.u32 %v403, 8
        %v444 = vmul.u32.u64.compose %v443, %v442
        %v445 = vextract.low.u32 %v444
        %v446 = vextract.high.u32 %v444
        %v447 = vmul.u32.u64.compose %v443, %v438
        %v448 = vextract.low.u32 %v447
        %v449 = vextract.high.u32 %v447
        %v450 = vmul.u32 %v443, %v434
        %v451 = vadd.s32 %v446, %v448
        %vm452 = vc.u32 %v446, %v448
        %v453 = vadd.s32 %v449, 1
        %v454 = vsel %vm452, %v453, %v449
        %v455 = vadd.s32 %v450, %v454
        %v456 = vadd.s32 %v455, 536870912
        %v457 = vshrl.u32 %v456, 30
        %v458 = vshll.u32 %v457, 30
        %v459 = vsub.s32 %v455, %v458
        %vm460 = vcmp.lt.s32.totalorder %v459, 0
        %v461 = vsub.s32 0, %v459
        %v462 = vsel %vm460, %v461, %v459
        %v463 = vclz %v462
        %v464 = vsub.s32 %v463, 2
        %vm465 = vcmp.gt.s32.totalorder 0, %v464
        %v466 = vsel %vm465, 0, %v464
        %v467 = vsub.s32 32, %v466
        %v468 = vshll.u32 %v459, %v466
        %v469 = vshrl.u32 %v451, %v467
        %v470 = vor.u32 %v468, %v469
        %v471 = vsub.s32 4294967266, %v466
        %v472 = vadd.s32 %v471, 127
        %v473 = vshll.u32 %v472, 23
        %v474 = vor.u32 4788187, %v473
        %v475 = vand.u32 2147483647, %v474
        %v477 = vcvt.s32.f32 %v470
        %v478 = vmul.f32 %v477, %v475
        %v479 = vxor.u32 %v478, 2147483648
        %v480 = vsel %vm397, %v479, %v478
        %v481 = vsub.s32 4, %v457
        %v482 = vsel %vm397, %v481, %v457
        %v483 = vsel %vm396, %v285, %v480
        %v484 = vsel %vm396, 0, %v482
        %v485 = vcosq.f32.pop %v483
        %v486 = vsinq.f32.pop %v483
        %vm487 = vweird.f32 %v285
        %v488 = vand.u32 %v484, 3
        %vm489 = vcmp.lt.s32.totalorder %v488, 2
        %vm490 = vcmp.eq.s32.totalorder %v488, 0
        %v491 = vxor.u32 %v486, 2147483648
        %v492 = vsel %vm490, %v485, %v491
        %vm493 = vcmp.eq.s32.totalorder %v488, 2
        %v494 = vxor.u32 %v485, 2147483648
        %v495 = vsel %vm493, %v494, %v486
        %v496 = vsel %vm489, %v492, %v495
        %v497 = vsel %vm487, nan, %v496
        %v499 = vcombine.high %v394, %v394
        %v500 = vrot.slane %v394, 5
        %v501 = vrot.slane %v499, 5
        %504 = vst [vmem:[#allocation2] sm:$0x38] %v500
        %505 = vst [vmem:[#allocation2 + $0x8] sm:$0x38] %v501
        %v507 = vcombine.high %v497, %v497
        %v508 = vrot.slane %v497, 2
        %v509 = vrot.slane %v507, 2
        %512 = vst [vmem:[#allocation2] sm:$0xc0] %v508
        %513 = vst [vmem:[#allocation2 + $0x8] sm:$0xc0] %v509
        %514 = vst [vmem:[#allocation2 + $0x10] sm:$0x1] %v508
        %515 = vst [vmem:[#allocation2 + $0x18] sm:$0x1] %v509
        %v516 = vmul.f32 %v394, 2.0
        %v517 = vmul.f32 %v516, %v497
        %v518 = vmul.f32 %v516, %v394
        %v519 = vsub.f32 1.0, %v518
        %v521 = vcombine.high %v517, %v517
        %v522 = vrot.slane %v517, 7
        %v523 = vrot.slane %v521, 7
        %526 = vst [vmem:[#allocation2 + $0x10] sm:$0xe] %v522
        %527 = vst [vmem:[#allocation2 + $0x18] sm:$0xe] %v523
        %v529 = vcombine.low %v519, %v519
        %531 = vst [vmem:[#allocation2 + $0x10] sm:$0x70] %v529
        %532 = vst [vmem:[#allocation2 + $0x18] sm:$0x70] %v519
        %v533 = vmul.f32 %v517, 2.0
        %v534 = vmul.f32 %v533, %v519
        %v535 = vmul.f32 %v533, %v517
        %v536 = vsub.f32 1.0, %v535
        %v538 = vcombine.high %v534, %v534
        %v539 = vrot.slane %v534, 1
        %v540 = vrot.slane %v538, 1
        %543 = vst [vmem:[#allocation2 + $0x10] sm:$0x80] %v539
        %544 = vst [vmem:[#allocation2 + $0x18] sm:$0x80] %v540
        %545 = vst [vmem:[#allocation2 + $0x20] sm:$0x3] %v539
        %546 = vst [vmem:[#allocation2 + $0x28] sm:$0x3] %v540
        %v548 = vcombine.high %v536, %v536
        %v549 = vrot.slane %v536, 6
        %v550 = vrot.slane %v548, 6
        %553 = vst [vmem:[#allocation2 + $0x20] sm:$0x1c] %v549
        %554 = vst [vmem:[#allocation2 + $0x28] sm:$0x1c] %v550
        %v555 = vmul.f32 %v534, 2.0
        %v556 = vmul.f32 %v555, %v536
        %v557 = vmul.f32 %v555, %v534
        %v558 = vsub.f32 1.0, %v557
        %v560 = vcombine.high %v556, %v556
        %v561 = vrot.slane %v556, 3
        %v562 = vrot.slane %v560, 3
        %565 = vst [vmem:[#allocation2 + $0x20] sm:$0xe0] %v561
        %566 = vst [vmem:[#allocation2 + $0x28] sm:$0xe0] %v562
        %v568 = vcombine.high %v558, %v558
        %570 = vst [vmem:[#allocation2 + $0x30] sm:$0x7] %v558
        %571 = vst [vmem:[#allocation2 + $0x38] sm:$0x7] %v568
        %v572 = vmul.f32 %v556, 2.0
        %v573 = vmul.f32 %v572, %v558
        %v574 = vmul.f32 %v572, %v556
        %v575 = vsub.f32 1.0, %v574
        %v577 = vcombine.high %v573, %v573
        %v578 = vrot.slane %v573, 5
        %v579 = vrot.slane %v577, 5
        %582 = vst [vmem:[#allocation2 + $0x30] sm:$0x38] %v578
        %583 = vst [vmem:[#allocation2 + $0x38] sm:$0x38] %v579
        %v585 = vcombine.high %v575, %v575
        %v586 = vrot.slane %v575, 2
        %v587 = vrot.slane %v585, 2
        %590 = vst [vmem:[#allocation2 + $0x30] sm:$0xc0] %v586
        %591 = vst [vmem:[#allocation2 + $0x38] sm:$0xc0] %v587
        %592 = vst [vmem:[#allocation2 + $0x40] sm:$0x1] %v586
        %593 = vst [vmem:[#allocation2 + $0x48] sm:$0x1] %v587
        %v594 = vmul.f32 %v573, 2.0
        %v595 = vmul.f32 %v594, %v575
        %v596 = vmul.f32 %v594, %v573
        %v597 = vsub.f32 1.0, %v596
        %v599 = vcombine.high %v595, %v595
        %v600 = vrot.slane %v595, 7
        %v601 = vrot.slane %v599, 7
        %604 = vst [vmem:[#allocation2 + $0x40] sm:$0xe] %v600
        %605 = vst [vmem:[#allocation2 + $0x48] sm:$0xe] %v601
        %v607 = vcombine.low %v597, %v597
        %609 = vst [vmem:[#allocation2 + $0x40] sm:$0x70] %v607
        %610 = vst [vmem:[#allocation2 + $0x48] sm:$0x70] %v597
        %v611 = vlaneseq
        %vm612 = vcmp.ge.s32.totalorder %v611, 0
        %vm613 = vcmp.lt.s32.totalorder %v611, 256
        %vm614 = vmand %vm612, %vm613
        %s615 = scalar_lea.vmem [#allocation2], 71
        %616 = vst.msk [vmem:[%s615] ss:$8 sm:$0x3] %vm614, 1.0
        %617 = vst.msk [vmem:[%s615] ss:$8 sm:$0x0] %vm614, 1.0
        %v618 = vld [vmem:[#allocation2] sm:$0xff]
        %v619 = vld [vmem:[#allocation2 + $0x8] sm:$0xff]
        %v620 = vld [vmem:[#allocation2 + $0x10] sm:$0xff]
        %v621 = vld [vmem:[#allocation2 + $0x18] sm:$0xff]
        %v622 = vld [vmem:[#allocation2 + $0x20] sm:$0xff]
        %v623 = vld [vmem:[#allocation2 + $0x28] sm:$0xff]
        %v624 = vld [vmem:[#allocation2 + $0x30] sm:$0xff]
        %v625 = vld [vmem:[#allocation2 + $0x38] sm:$0xff]
        %v626 = vld [vmem:[#allocation2 + $0x40] sm:$0xff]
        %v627 = vld [vmem:[#allocation2 + $0x48] sm:$0xff]
        %v628 = vld [vmem:[%s1] sm:$0xff]
        %v629 = vld [vmem:[%s1 + $0x8] sm:$0xff]
        %v630 = vld [vmem:[%s1 + $0x10] sm:$0xff]
        %v631 = vld [vmem:[%s1 + $0x18] sm:$0xff]
        %vm632 = vcmask 326656
        %v634 = vsel %vm632, %v628, 0
        %v637 = vsel %vm632, %v629, 0
        %v640 = vsel %vm632, %v630, 0
        %v643 = vsel %vm632, %v631, 0
        %645 = vmatprep.subr.mxu0 %v619
        %646 = vmatpush1.msra.mxu0 %v618
        %647 = vmatprep.subr.mxu0 %v621
        %648 = vmatpush1.msra.mxu0 %v620
        %649 = vmatprep.subr.mxu0 %v623
        %650 = vmatpush1.msra.mxu0 %v622
        %651 = vmatprep.subr.mxu0 %v625
        %652 = vmatpush1.msra.mxu0 %v624
        %653 = vmatprep.subr.mxu0 %v627
        %654 = vmatpush1.msra.mxu0 %v626
        %655 = vmatprep.subr.mxu0 0.0
        %656 = vmatpush1.msra.mxu0 0.0
        %657 = vmatprep.subr.mxu0 0.0
        %658 = vmatpush1.msra.mxu0 0.0
        %659 = vmatprep.subr.mxu0 0.0
        %660 = vmatpush1.msra.mxu0 0.0
        %661 = vmatprep.subr.mxu0 0.0
        %662 = vmatpush1.msra.mxu0 0.0
        %663 = vmatprep.subr.mxu0 0.0
        %664 = vmatpush1.msra.mxu0 0.0
        %665 = vmatprep.subr.mxu0 0.0
        %666 = vmatpush1.msra.mxu0 0.0
        %667 = vmatprep.subr.mxu0 0.0
        %668 = vmatpush1.msra.mxu0 0.0
        %669 = vmatprep.subr.mxu0 0.0
        %670 = vmatpush1.msra.mxu0 0.0
        %671 = vmatprep.subr.mxu0 0.0
        %672 = vmatpush1.msra.mxu0 0.0
        %673 = vmatprep.subr.mxu0 0.0
        %674 = vmatpush1.msra.mxu0 0.0
        %675 = vmatprep.subr.mxu0 0.0
        %676 = vmatpush1.msra.mxu0 0.0
        %677 = vmatprep.subr.mxu0 0.0
        %678 = vmatpush1.msra.mxu0 0.0
        %679 = vmatprep.subr.mxu0 0.0
        %680 = vmatpush1.msra.mxu0 0.0
        %681 = vmatprep.subr.mxu0 0.0
        %682 = vmatpush1.msra.mxu0 0.0
        %683 = vmatprep.subr.mxu0 0.0
        %684 = vmatpush1.msra.mxu0 0.0
        %685 = vmatprep.subr.mxu0 0.0
        %686 = vmatpush1.msra.mxu0 0.0
        %687 = vmatprep.subr.mxu0 0.0
        %688 = vmatpush1.msra.mxu0 0.0
        %689 = vmatprep.subr.mxu0 0.0
        %690 = vmatpush1.msra.mxu0 0.0
        %691 = vmatprep.subr.mxu0 0.0
        %692 = vmatpush1.msra.mxu0 0.0
        %693 = vmatprep.subr.mxu0 0.0
        %694 = vmatpush1.msra.mxu0 0.0
        %695 = vmatprep.subr.mxu0 0.0
        %696 = vmatpush1.msra.mxu0 0.0
        %697 = vmatprep.subr.mxu0 0.0
        %698 = vmatpush1.msra.mxu0 0.0
        %699 = vmatprep.subr.mxu0 0.0
        %700 = vmatpush1.msra.mxu0 0.0
        %701 = vmatprep.subr.mxu0 0.0
        %702 = vmatpush1.msra.mxu0 0.0
        %703 = vmatprep.subr.mxu0 0.0
        %704 = vmatpush1.msra.mxu0 0.0
        %705 = vmatprep.subr.mxu0 0.0
        %706 = vmatpush1.msra.mxu0 0.0
        %707 = vmatprep.subr.mxu0 0.0
        %708 = vmatpush1.msra.mxu0 0.0
        %709 = vmatprep.mubr.f32.mxu0 0.0
        %710 = vmatmul.mubr.f32.gmra.mrb[0].mxu0 %v634
        %v711 = vpop.f32.mrb[0].mxu0
        %v712 = vadd.f32 0.0, %v711
        %v713 = vpop.f32.mrb[0].mxu0
        %v714 = vadd.f32 0.0, %v713
        %715 = vmatprep.mubr.f32.mxu0 0.0
        %716 = vmatmul.mubr.f32.gmra.mrb[0].mxu0 %v637
        %v717 = vpop.f32.mrb[0].mxu0
        %v718 = vadd.f32 0.0, %v717
        %v719 = vpop.f32.mrb[0].mxu0
        %v720 = vadd.f32 0.0, %v719
        %721 = vmatprep.mubr.f32.mxu0 0.0
        %722 = vmatmul.mubr.f32.gmra.mrb[0].mxu0 %v640
        %v723 = vpop.f32.mrb[0].mxu0
        %v724 = vadd.f32 0.0, %v723
        %v725 = vpop.f32.mrb[0].mxu0
        %v726 = vadd.f32 0.0, %v725
        %727 = vmatprep.mubr.f32.mxu0 0.0
        %728 = vmatmul.mubr.f32.gmra.mrb[0].mxu0 %v643
        %v729 = vpop.f32.mrb[0].mxu0
        %v730 = vadd.f32 0.0, %v729
        %v731 = vpop.f32.mrb[0].mxu0
        %v732 = vadd.f32 0.0, %v731
        %733 = vdwg.mxu0
        %v734 = vmax.f32 %v712, 0.0
        %v735 = vmax.f32 %v714, 0.0
        %v736 = vmax.f32 %v718, 0.0
        %v737 = vmax.f32 %v720, 0.0
        %v738 = vmax.f32 %v724, 0.0
        %v739 = vmax.f32 %v726, 0.0
        %v740 = vmax.f32 %v730, 0.0
        %v741 = vmax.f32 %v732, 0.0
        %vm742 = vcmp.ne.f32.partialorder %v712, %v712
        %vm743 = vcmp.ne.f32.partialorder %v714, %v714
        %vm744 = vcmp.ne.f32.partialorder %v718, %v718
        %vm745 = vcmp.ne.f32.partialorder %v720, %v720
        %vm746 = vcmp.ne.f32.partialorder %v724, %v724
        %vm747 = vcmp.ne.f32.partialorder %v726, %v726
        %vm748 = vcmp.ne.f32.partialorder %v730, %v730
        %vm749 = vcmp.ne.f32.partialorder %v732, %v732
        %v750 = vadd.f32 %v712, 0.0
        %v751 = vadd.f32 %v714, 0.0
        %v752 = vadd.f32 %v718, 0.0
        %v753 = vadd.f32 %v720, 0.0
        %v754 = vadd.f32 %v724, 0.0
        %v755 = vadd.f32 %v726, 0.0
        %v756 = vadd.f32 %v730, 0.0
        %v757 = vadd.f32 %v732, 0.0
        %v758 = vand.u32 2147483647, %v712
        %v759 = vand.u32 2147483647, %v714
        %v760 = vand.u32 2147483647, %v718
        %v761 = vand.u32 2147483647, %v720
        %v762 = vand.u32 2147483647, %v724
        %v763 = vand.u32 2147483647, %v726
        %v764 = vand.u32 2147483647, %v730
        %v765 = vand.u32 2147483647, %v732
        %v766 = vsub.f32 0.0, %v758
        %v767 = vsub.f32 0.0, %v759
        %v768 = vsub.f32 0.0, %v760
        %v769 = vsub.f32 0.0, %v761
        %v770 = vsub.f32 0.0, %v762
        %v771 = vsub.f32 0.0, %v763
        %v772 = vsub.f32 0.0, %v764
        %v773 = vsub.f32 0.0, %v765
        %v774 = vmul.f32 %v766, 1.442695
        %v775 = vpow.pop %v774
        %v776 = vmul.f32 %v767, 1.442695
        %v777 = vpow.pop %v776
        %v778 = vmul.f32 %v768, 1.442695
        %v779 = vpow.pop %v778
        %v780 = vmul.f32 %v769, 1.442695
        %v781 = vpow.pop %v780
        %v782 = vmul.f32 %v770, 1.442695
        %v783 = vpow.pop %v782
        %v784 = vmul.f32 %v771, 1.442695
        %v785 = vpow.pop %v784
        %v786 = vmul.f32 %v772, 1.442695
        %v787 = vpow.pop %v786
        %v788 = vmul.f32 %v773, 1.442695
        %v789 = vpow.pop %v788
        %v790 = vadd.f32 %v775, 1.0
        %v791 = vlog2.pop %v790
        %v792 = vmul.f32 %v791, 0.6931472
        %v793 = vmul.f32 -0.5, %v775
        %v794 = vadd.f32 %v793, 1.0
        %v795 = vmul.f32 %v794, %v775
        %v796 = vand.u32 2147483647, %v775
        %vm797 = vcmp.lt.f32.partialorder %v796, 0.0004427343
        %v798 = vsel %vm797, %v795, %v792
        %v799 = vadd.f32 %v777, 1.0
        %v800 = vlog2.pop %v799
        %v801 = vmul.f32 %v800, 0.6931472
        %v802 = vmul.f32 -0.5, %v777
        %v803 = vadd.f32 %v802, 1.0
        %v804 = vmul.f32 %v803, %v777
        %v805 = vand.u32 2147483647, %v777
        %vm806 = vcmp.lt.f32.partialorder %v805, 0.0004427343
        %v807 = vsel %vm806, %v804, %v801
        %v808 = vadd.f32 %v779, 1.0
        %v809 = vlog2.pop %v808
        %v810 = vmul.f32 %v809, 0.6931472
        %v811 = vmul.f32 -0.5, %v779
        %v812 = vadd.f32 %v811, 1.0
        %v813 = vmul.f32 %v812, %v779
        %v814 = vand.u32 2147483647, %v779
        %vm815 = vcmp.lt.f32.partialorder %v814, 0.0004427343
        %v816 = vsel %vm815, %v813, %v810
        %v817 = vadd.f32 %v781, 1.0
        %v818 = vlog2.pop %v817
        %v819 = vmul.f32 %v818, 0.6931472
        %v820 = vmul.f32 -0.5, %v781
        %v821 = vadd.f32 %v820, 1.0
        %v822 = vmul.f32 %v821, %v781
        %v823 = vand.u32 2147483647, %v781
        %vm824 = vcmp.lt.f32.partialorder %v823, 0.0004427343
        %v825 = vsel %vm824, %v822, %v819
        %v826 = vadd.f32 %v783, 1.0
        %v827 = vlog2.pop %v826
        %v828 = vmul.f32 %v827, 0.6931472
        %v829 = vmul.f32 -0.5, %v783
        %v830 = vadd.f32 %v829, 1.0
        %v831 = vmul.f32 %v830, %v783
        %v832 = vand.u32 2147483647, %v783
        %vm833 = vcmp.lt.f32.partialorder %v832, 0.0004427343
        %v834 = vsel %vm833, %v831, %v828
        %v835 = vadd.f32 %v785, 1.0
        %v836 = vlog2.pop %v835
        %v837 = vmul.f32 %v836, 0.6931472
        %v838 = vmul.f32 -0.5, %v785
        %v839 = vadd.f32 %v838, 1.0
        %v840 = vmul.f32 %v839, %v785
        %v841 = vand.u32 2147483647, %v785
        %vm842 = vcmp.lt.f32.partialorder %v841, 0.0004427343
        %v843 = vsel %vm842, %v840, %v837
        %v844 = vadd.f32 %v787, 1.0
        %v845 = vlog2.pop %v844
        %v846 = vmul.f32 %v845, 0.6931472
        %v847 = vmul.f32 -0.5, %v787
        %v848 = vadd.f32 %v847, 1.0
        %v849 = vmul.f32 %v848, %v787
        %v850 = vand.u32 2147483647, %v787
        %vm851 = vcmp.lt.f32.partialorder %v850, 0.0004427343
        %v852 = vsel %vm851, %v849, %v846
        %v853 = vadd.f32 %v789, 1.0
        %v854 = vlog2.pop %v853
        %v855 = vmul.f32 %v854, 0.6931472
        %v856 = vmul.f32 -0.5, %v789
        %v857 = vadd.f32 %v856, 1.0
        %v858 = vmul.f32 %v857, %v789
        %v859 = vand.u32 2147483647, %v789
        %vm860 = vcmp.lt.f32.partialorder %v859, 0.0004427343
        %v861 = vsel %vm860, %v858, %v855
        %v862 = vadd.f32 %v734, %v798
        %v863 = vadd.f32 %v735, %v807
        %v864 = vadd.f32 %v736, %v816
        %v865 = vadd.f32 %v737, %v825
        %v866 = vadd.f32 %v738, %v834
        %v867 = vadd.f32 %v739, %v843
        %v868 = vadd.f32 %v740, %v852
        %v869 = vadd.f32 %v741, %v861
        %v870 = vsel %vm742, %v750, %v862
        %v871 = vsel %vm743, %v751, %v863
        %v872 = vsel %vm744, %v752, %v864
        %v873 = vsel %vm745, %v753, %v865
        %v874 = vsel %vm746, %v754, %v866
        %v875 = vsel %vm747, %v755, %v867
        %v876 = vsel %vm748, %v756, %v868
        %v877 = vsel %vm749, %v757, %v869
        %v878 = vld [vmem:[#allocation6] sm:$0xff]
        %v879 = vld [vmem:[#allocation6 + $0x8] sm:$0xff]
        %v880 = vld [vmem:[#allocation6 + $0x10] sm:$0xff]
        %v881 = vld [vmem:[#allocation6 + $0x18] sm:$0xff]
        %v882 = vld [vmem:[%s3] sm:$0xff]
        %v883 = vld [vmem:[%s3 + $0x8] sm:$0xff]
        %v884 = vld [vmem:[%s3 + $0x10] sm:$0xff]
        %v885 = vld [vmem:[%s3 + $0x18] sm:$0xff]
        %887 = vset.pattern.permute.xlu0 0
        %888 = vperm.xlu0 %887, %v882
        %v889 = vpop.permute.xlu0 %888
        %892 = vset.pattern.permute.xlu0 0
        %893 = vperm.xlu0 %892, %v883
        %v894 = vpop.permute.xlu0 %893
        %897 = vset.pattern.permute.xlu0 0
        %898 = vperm.xlu0 %897, %v884
        %v899 = vpop.permute.xlu0 %898
        %902 = vset.pattern.permute.xlu0 0
        %903 = vperm.xlu0 %902, %v885
        %v904 = vpop.permute.xlu0 %903
        %vm906 = vcmask 261120
        %v908 = vsel %vm906, %v878, 0
        %v911 = vsel %vm906, %v879, 0
        %v914 = vsel %vm906, %v880, 0
        %v917 = vsel %vm906, %v881, 0
        %919 = vmatprep.subr.mxu0 %v871
        %920 = vmatpush1.msra.mxu0 %v870
        %921 = vmatprep.subr.mxu0 %v873
        %922 = vmatpush1.msra.mxu0 %v872
        %923 = vmatprep.subr.mxu0 %v875
        %924 = vmatpush1.msra.mxu0 %v874
        %925 = vmatprep.subr.mxu0 %v877
        %926 = vmatpush1.msra.mxu0 %v876
        %927 = vmatprep.subr.mxu0 0.0
        %928 = vmatpush1.msra.mxu0 0.0
        %929 = vmatprep.subr.mxu0 0.0
        %930 = vmatpush1.msra.mxu0 0.0
        %931 = vmatprep.subr.mxu0 0.0
        %932 = vmatpush1.msra.mxu0 0.0
        %933 = vmatprep.subr.mxu0 0.0
        %934 = vmatpush1.msra.mxu0 0.0
        %935 = vmatprep.subr.mxu0 0.0
        %936 = vmatpush1.msra.mxu0 0.0
        %937 = vmatprep.subr.mxu0 0.0
        %938 = vmatpush1.msra.mxu0 0.0
        %939 = vmatprep.subr.mxu0 0.0
        %940 = vmatpush1.msra.mxu0 0.0
        %941 = vmatprep.subr.mxu0 0.0
        %942 = vmatpush1.msra.mxu0 0.0
        %943 = vmatprep.subr.mxu0 0.0
        %944 = vmatpush1.msra.mxu0 0.0
        %945 = vmatprep.subr.mxu0 0.0
        %946 = vmatpush1.msra.mxu0 0.0
        %947 = vmatprep.subr.mxu0 0.0
        %948 = vmatpush1.msra.mxu0 0.0
        %949 = vmatprep.subr.mxu0 0.0
        %950 = vmatpush1.msra.mxu0 0.0
        %951 = vmatprep.subr.mxu0 0.0
        %952 = vmatpush1.msra.mxu0 0.0
        %953 = vmatprep.subr.mxu0 0.0
        %954 = vmatpush1.msra.mxu0 0.0
        %955 = vmatprep.subr.mxu0 0.0
        %956 = vmatpush1.msra.mxu0 0.0
        %957 = vmatprep.subr.mxu0 0.0
        %958 = vmatpush1.msra.mxu0 0.0
        %959 = vmatprep.subr.mxu0 0.0
        %960 = vmatpush1.msra.mxu0 0.0
        %961 = vmatprep.subr.mxu0 0.0
        %962 = vmatpush1.msra.mxu0 0.0
        %963 = vmatprep.subr.mxu0 0.0
        %964 = vmatpush1.msra.mxu0 0.0
        %965 = vmatprep.subr.mxu0 0.0
        %966 = vmatpush1.msra.mxu0 0.0
        %967 = vmatprep.subr.mxu0 0.0
        %968 = vmatpush1.msra.mxu0 0.0
        %969 = vmatprep.subr.mxu0 0.0
        %970 = vmatpush1.msra.mxu0 0.0
        %971 = vmatprep.subr.mxu0 0.0
        %972 = vmatpush1.msra.mxu0 0.0
        %973 = vmatprep.subr.mxu0 0.0
        %974 = vmatpush1.msra.mxu0 0.0
        %975 = vmatprep.subr.mxu0 0.0
        %976 = vmatpush1.msra.mxu0 0.0
        %977 = vmatprep.subr.mxu0 0.0
        %978 = vmatpush1.msra.mxu0 0.0
        %979 = vmatprep.subr.mxu0 0.0
        %980 = vmatpush1.msra.mxu0 0.0
        %981 = vmatprep.subr.mxu0 0.0
        %982 = vmatpush1.msra.mxu0 0.0
        %983 = vmatprep.mubr.f32.mxu0 0.0
        %984 = vmatmul.mubr.f32.gmra.mrb[0].mxu0 %v908
        %v985 = vpop.f32.mrb[0].mxu0
        %v986 = vadd.f32 %v889, %v985
        %v987 = vpop.f32.mrb[0].mxu0
        %v988 = vadd.f32 %v889, %v987
        %989 = vmatprep.mubr.f32.mxu0 0.0
        %990 = vmatmul.mubr.f32.gmra.mrb[0].mxu0 %v911
        %v991 = vpop.f32.mrb[0].mxu0
        %v992 = vadd.f32 %v894, %v991
        %v993 = vpop.f32.mrb[0].mxu0
        %v994 = vadd.f32 %v894, %v993
        %995 = vmatprep.mubr.f32.mxu0 0.0
        %996 = vmatmul.mubr.f32.gmra.mrb[0].mxu0 %v914
        %v997 = vpop.f32.mrb[0].mxu0
        %v998 = vadd.f32 %v899, %v997
        %v999 = vpop.f32.mrb[0].mxu0
        %v1000 = vadd.f32 %v899, %v999
        %1001 = vmatprep.mubr.f32.mxu0 0.0
        %1002 = vmatmul.mubr.f32.gmra.mrb[0].mxu0 %v917
        %v1003 = vpop.f32.mrb[0].mxu0
        %v1004 = vadd.f32 %v904, %v1003
        %v1005 = vpop.f32.mrb[0].mxu0
        %v1006 = vadd.f32 %v904, %v1005
        %1007 = vdwg.mxu0
        %v1008 = vmax.f32 %v986, 0.0
        %v1009 = vmax.f32 %v988, 0.0
        %v1010 = vmax.f32 %v992, 0.0
        %v1011 = vmax.f32 %v994, 0.0
        %v1012 = vmax.f32 %v998, 0.0
        %v1013 = vmax.f32 %v1000, 0.0
        %v1014 = vmax.f32 %v1004, 0.0
        %v1015 = vmax.f32 %v1006, 0.0
        %vm1016 = vcmp.ne.f32.partialorder %v986, %v986
        %vm1017 = vcmp.ne.f32.partialorder %v988, %v988
        %vm1018 = vcmp.ne.f32.partialorder %v992, %v992
        %vm1019 = vcmp.ne.f32.partialorder %v994, %v994
        %vm1020 = vcmp.ne.f32.partialorder %v998, %v998
        %vm1021 = vcmp.ne.f32.partialorder %v1000, %v1000
        %vm1022 = vcmp.ne.f32.partialorder %v1004, %v1004
        %vm1023 = vcmp.ne.f32.partialorder %v1006, %v1006
        %v1024 = vadd.f32 %v986, 0.0
        %v1025 = vadd.f32 %v988, 0.0
        %v1026 = vadd.f32 %v992, 0.0
        %v1027 = vadd.f32 %v994, 0.0
        %v1028 = vadd.f32 %v998, 0.0
        %v1029 = vadd.f32 %v1000, 0.0
        %v1030 = vadd.f32 %v1004, 0.0
        %v1031 = vadd.f32 %v1006, 0.0
        %v1032 = vand.u32 2147483647, %v986
        %v1033 = vand.u32 2147483647, %v988
        %v1034 = vand.u32 2147483647, %v992
        %v1035 = vand.u32 2147483647, %v994
        %v1036 = vand.u32 2147483647, %v998
        %v1037 = vand.u32 2147483647, %v1000
        %v1038 = vand.u32 2147483647, %v1004
        %v1039 = vand.u32 2147483647, %v1006
        %v1040 = vsub.f32 0.0, %v1032
        %v1041 = vsub.f32 0.0, %v1033
        %v1042 = vsub.f32 0.0, %v1034
        %v1043 = vsub.f32 0.0, %v1035
        %v1044 = vsub.f32 0.0, %v1036
        %v1045 = vsub.f32 0.0, %v1037
        %v1046 = vsub.f32 0.0, %v1038
        %v1047 = vsub.f32 0.0, %v1039
        %v1048 = vmul.f32 %v1040, 1.442695
        %v1049 = vpow.pop %v1048
        %v1050 = vmul.f32 %v1041, 1.442695
        %v1051 = vpow.pop %v1050
        %v1052 = vmul.f32 %v1042, 1.442695
        %v1053 = vpow.pop %v1052
        %v1054 = vmul.f32 %v1043, 1.442695
        %v1055 = vpow.pop %v1054
        %v1056 = vmul.f32 %v1044, 1.442695
        %v1057 = vpow.pop %v1056
        %v1058 = vmul.f32 %v1045, 1.442695
        %v1059 = vpow.pop %v1058
        %v1060 = vmul.f32 %v1046, 1.442695
        %v1061 = vpow.pop %v1060
        %v1062 = vmul.f32 %v1047, 1.442695
        %v1063 = vpow.pop %v1062
        %v1064 = vadd.f32 %v1049, 1.0
        %v1065 = vlog2.pop %v1064
        %v1066 = vmul.f32 %v1065, 0.6931472
        %v1067 = vmul.f32 -0.5, %v1049
        %v1068 = vadd.f32 %v1067, 1.0
        %v1069 = vmul.f32 %v1068, %v1049
        %v1070 = vand.u32 2147483647, %v1049
        %vm1071 = vcmp.lt.f32.partialorder %v1070, 0.0004427343
        %v1072 = vsel %vm1071, %v1069, %v1066
        %v1073 = vadd.f32 %v1051, 1.0
        %v1074 = vlog2.pop %v1073
        %v1075 = vmul.f32 %v1074, 0.6931472
        %v1076 = vmul.f32 -0.5, %v1051
        %v1077 = vadd.f32 %v1076, 1.0
        %v1078 = vmul.f32 %v1077, %v1051
        %v1079 = vand.u32 2147483647, %v1051
        %vm1080 = vcmp.lt.f32.partialorder %v1079, 0.0004427343
        %v1081 = vsel %vm1080, %v1078, %v1075
        %v1082 = vadd.f32 %v1053, 1.0
        %v1083 = vlog2.pop %v1082
        %v1084 = vmul.f32 %v1083, 0.6931472
        %v1085 = vmul.f32 -0.5, %v1053
        %v1086 = vadd.f32 %v1085, 1.0
        %v1087 = vmul.f32 %v1086, %v1053
        %v1088 = vand.u32 2147483647, %v1053
        %vm1089 = vcmp.lt.f32.partialorder %v1088, 0.0004427343
        %v1090 = vsel %vm1089, %v1087, %v1084
        %v1091 = vadd.f32 %v1055, 1.0
        %v1092 = vlog2.pop %v1091
        %v1093 = vmul.f32 %v1092, 0.6931472
        %v1094 = vmul.f32 -0.5, %v1055
        %v1095 = vadd.f32 %v1094, 1.0
        %v1096 = vmul.f32 %v1095, %v1055
        %v1097 = vand.u32 2147483647, %v1055
        %vm1098 = vcmp.lt.f32.partialorder %v1097, 0.0004427343
        %v1099 = vsel %vm1098, %v1096, %v1093
        %v1100 = vadd.f32 %v1057, 1.0
        %v1101 = vlog2.pop %v1100
        %v1102 = vmul.f32 %v1101, 0.6931472
        %v1103 = vmul.f32 -0.5, %v1057
        %v1104 = vadd.f32 %v1103, 1.0
        %v1105 = vmul.f32 %v1104, %v1057
        %v1106 = vand.u32 2147483647, %v1057
        %vm1107 = vcmp.lt.f32.partialorder %v1106, 0.0004427343
        %v1108 = vsel %vm1107, %v1105, %v1102
        %v1109 = vadd.f32 %v1059, 1.0
        %v1110 = vlog2.pop %v1109
        %v1111 = vmul.f32 %v1110, 0.6931472
        %v1112 = vmul.f32 -0.5, %v1059
        %v1113 = vadd.f32 %v1112, 1.0
        %v1114 = vmul.f32 %v1113, %v1059
        %v1115 = vand.u32 2147483647, %v1059
        %vm1116 = vcmp.lt.f32.partialorder %v1115, 0.0004427343
        %v1117 = vsel %vm1116, %v1114, %v1111
        %v1118 = vadd.f32 %v1061, 1.0
        %v1119 = vlog2.pop %v1118
        %v1120 = vmul.f32 %v1119, 0.6931472
        %v1121 = vmul.f32 -0.5, %v1061
        %v1122 = vadd.f32 %v1121, 1.0
        %v1123 = vmul.f32 %v1122, %v1061
        %v1124 = vand.u32 2147483647, %v1061
        %vm1125 = vcmp.lt.f32.partialorder %v1124, 0.0004427343
        %v1126 = vsel %vm1125, %v1123, %v1120
        %v1127 = vadd.f32 %v1063, 1.0
        %v1128 = vlog2.pop %v1127
        %v1129 = vmul.f32 %v1128, 0.6931472
        %v1130 = vmul.f32 -0.5, %v1063
        %v1131 = vadd.f32 %v1130, 1.0
        %v1132 = vmul.f32 %v1131, %v1063
        %v1133 = vand.u32 2147483647, %v1063
        %vm1134 = vcmp.lt.f32.partialorder %v1133, 0.0004427343
        %v1135 = vsel %vm1134, %v1132, %v1129
        %v1136 = vadd.f32 %v1008, %v1072
        %v1137 = vadd.f32 %v1009, %v1081
        %v1138 = vadd.f32 %v1010, %v1090
        %v1139 = vadd.f32 %v1011, %v1099
        %v1140 = vadd.f32 %v1012, %v1108
        %v1141 = vadd.f32 %v1013, %v1117
        %v1142 = vadd.f32 %v1014, %v1126
        %v1143 = vadd.f32 %v1015, %v1135
        %v1144 = vsel %vm1016, %v1024, %v1136
        %v1145 = vsel %vm1017, %v1025, %v1137
        %v1146 = vsel %vm1018, %v1026, %v1138
        %v1147 = vsel %vm1019, %v1027, %v1139
        %v1148 = vsel %vm1020, %v1028, %v1140
        %v1149 = vsel %vm1021, %v1029, %v1141
        %v1150 = vsel %vm1022, %v1030, %v1142
        %v1151 = vsel %vm1023, %v1031, %v1143
        %v1152 = vld [vmem:[%s4] sm:$0x7]
        %v1153 = vld [vmem:[%s5] sm:$0x7]
        %1155 = vset.pattern.permute.xlu0 0
        %1156 = vperm.xlu0 %1155, %v1153
        %v1157 = vpop.permute.xlu0 %1156
        %v1160 = vsel %vm906, %v1152, 0
        %1162 = vmatprep.subr.mxu0 %v1145
        %1163 = vmatpush1.msra.mxu0 %v1144
        %1164 = vmatprep.subr.mxu0 %v1147
        %1165 = vmatpush1.msra.mxu0 %v1146
        %1166 = vmatprep.subr.mxu0 %v1149
        %1167 = vmatpush1.msra.mxu0 %v1148
        %1168 = vmatprep.subr.mxu0 %v1151
        %1169 = vmatpush1.msra.mxu0 %v1150
        %1170 = vmatprep.subr.mxu0 0.0
        %1171 = vmatpush1.msra.mxu0 0.0
        %1172 = vmatprep.subr.mxu0 0.0
        %1173 = vmatpush1.msra.mxu0 0.0
        %1174 = vmatprep.subr.mxu0 0.0
        %1175 = vmatpush1.msra.mxu0 0.0
        %1176 = vmatprep.subr.mxu0 0.0
        %1177 = vmatpush1.msra.mxu0 0.0
        %1178 = vmatprep.subr.mxu0 0.0
        %1179 = vmatpush1.msra.mxu0 0.0
        %1180 = vmatprep.subr.mxu0 0.0
        %1181 = vmatpush1.msra.mxu0 0.0
        %1182 = vmatprep.subr.mxu0 0.0
        %1183 = vmatpush1.msra.mxu0 0.0
        %1184 = vmatprep.subr.mxu0 0.0
        %1185 = vmatpush1.msra.mxu0 0.0
        %1186 = vmatprep.subr.mxu0 0.0
        %1187 = vmatpush1.msra.mxu0 0.0
        %1188 = vmatprep.subr.mxu0 0.0
        %1189 = vmatpush1.msra.mxu0 0.0
        %1190 = vmatprep.subr.mxu0 0.0
        %1191 = vmatpush1.msra.mxu0 0.0
        %1192 = vmatprep.subr.mxu0 0.0
        %1193 = vmatpush1.msra.mxu0 0.0
        %1194 = vmatprep.subr.mxu0 0.0
        %1195 = vmatpush1.msra.mxu0 0.0
        %1196 = vmatprep.subr.mxu0 0.0
        %1197 = vmatpush1.msra.mxu0 0.0
        %1198 = vmatprep.subr.mxu0 0.0
        %1199 = vmatpush1.msra.mxu0 0.0
        %1200 = vmatprep.subr.mxu0 0.0
        %1201 = vmatpush1.msra.mxu0 0.0
        %1202 = vmatprep.subr.mxu0 0.0
        %1203 = vmatpush1.msra.mxu0 0.0
        %1204 = vmatprep.subr.mxu0 0.0
        %1205 = vmatpush1.msra.mxu0 0.0
        %1206 = vmatprep.subr.mxu0 0.0
        %1207 = vmatpush1.msra.mxu0 0.0
        %1208 = vmatprep.subr.mxu0 0.0
        %1209 = vmatpush1.msra.mxu0 0.0
        %1210 = vmatprep.subr.mxu0 0.0
        %1211 = vmatpush1.msra.mxu0 0.0
        %1212 = vmatprep.subr.mxu0 0.0
        %1213 = vmatpush1.msra.mxu0 0.0
        %1214 = vmatprep.subr.mxu0 0.0
        %1215 = vmatpush1.msra.mxu0 0.0
        %1216 = vmatprep.subr.mxu0 0.0
        %1217 = vmatpush1.msra.mxu0 0.0
        %1218 = vmatprep.subr.mxu0 0.0
        %1219 = vmatpush1.msra.mxu0 0.0
        %1220 = vmatprep.subr.mxu0 0.0
        %1221 = vmatpush1.msra.mxu0 0.0
        %1222 = vmatprep.subr.mxu0 0.0
        %1223 = vmatpush1.msra.mxu0 0.0
        %1224 = vmatprep.subr.mxu0 0.0
        %1225 = vmatpush1.msra.mxu0 0.0
        %1226 = vmatprep.mubr.f32.mxu0 0.0
        %1227 = vmatmul.mubr.f32.gmra.mrb[0].mxu0 %v1160
        %v1228 = vpop.f32.mrb[0].mxu0
        %v1229 = vadd.f32 %v1157, %v1228
        %v1230 = vpop.f32.mrb[0].mxu0
        %v1231 = vadd.f32 %v1157, %v1230
        %1232 = vdwg.mxu0
        %v1233 = vtanh.pop %v1229
        %v1234 = vtanh.pop %v1231
        %v1235 = vmul.f32 %v1233, 0.05
        %v1236 = vmul.f32 %v1234, 0.05
        %v1239 = vcombine.low %v1235, %v1236
        %1241 = vst [vmem:[%s282] sm:$0x77] %v1239
        %s1242 = sand.u32 %s163, 1
        %s1243 = scalar_lea.sflag [#allocation5], %s1242
        %s1244 = sand.u32 %s163, 1
        %s1245 = smul.addr %s1244, 8
        %s1246 = scalar_lea.vmem [#allocation8], %s1245
        // Predicated region
        $region53: #{tpu_custom_call.1} parent=43 // pred_check
          %p1247 = pneg %p173
        $region54: #{tpu_custom_call.1} parent=43 // pred_check_branch
          %1249 = sbr.rel (%p1247) target = $region56
        $region55: #{tpu_custom_call.1} parent=43 // pred_region
          %s1250 = smul.u32 2, %s24
          %s1252 = ssub.s32 128, 128
          %1253 = vsyncadd %s1243, %s1252
          %s1254 = smul.addr %s1250, 64
          %s1255 = scalar_lea.hbm %s6, %s1254
          %s1257 = sshll.u32 %s1246, 4
          %s1258 = int_to_ptr.vmem [resolvable:$true] %s1257
          %1260 = dma.vmem_to_hbm [thread:$0]  %s1258, 128, %s1255, %s1243
        $region56: #{tpu_custom_call.1} parent=43 // pred_fallthru
          _
      $region44: #{tpu_custom_call.1} parent=5 // pred_fallthru
        _
      %p1261 = scmp.le.s32.totalorder 2, %s19
      // Predicated region
      $region57: #{tpu_custom_call.1} parent=5 // pred_check
        %p1262 = pneg %p1261
      $region58: #{tpu_custom_call.1} parent=5 // pred_check_branch
        %1264 = sbr.rel (%p1262) target = $region60
      $region59: #{tpu_custom_call.1} parent=5 // pred_region
        %s1265 = ssub.s32 %s19, 2
        // Predicated region
        $region61: #{tpu_custom_call.1} parent=59 // pred_check
          %p1266 = pneg %p179
        $region62: #{tpu_custom_call.1} parent=59 // pred_check_branch
          %1268 = sbr.rel (%p1266) target = $region64
        $region63: #{tpu_custom_call.1} parent=59 // pred_region
          %s1269 = sand.u32 %s164, 1
          %s1270 = scalar_lea.sflag [#allocation5], %s1269
          %s1271 = sand.u32 %s164, 1
          %s1272 = smul.addr %s1271, 8
          %s1273 = scalar_lea.vmem [#allocation8], %s1272
          %1274 = dma.done %s1270, 128
        $region64: #{tpu_custom_call.1} parent=59 // pred_fallthru
          _
      $region60: #{tpu_custom_call.1} parent=5 // pred_fallthru
        _
    $region6: #{tpu_custom_call.1} parent=1 // loop_footer
      %s23 = sadd.s32 1, %s19
    $region7: #{tpu_custom_call.1} parent=1 // loop_footer_branch
      %18 = sbr.rel target = $region3
    $region8: #{tpu_custom_call.1} parent=1 // loop_exit
      _
    %1275 = vsyncpa [#allocation4], 1
    %s1276 = scalar_lea.sflag [#allocation4], 1
    %1277 = vsyncpa %s1276, 1
    %1278 = vsyncpa [#allocation7], 1
    %1279 = vsyncpa [#allocation5], 1
    %s1280 = scalar_lea.sflag [#allocation5], 1
    %1281 = vsyncpa %s1280, 1

</llo_original>
